<compile_context>
chip_gen: v7x
topology: tpu7x:2x2x1
jax: 0.10.0
libtpu: 0.0.40
codegen_flags: <defaults>
</compile_context>

<pallas_src>
from functools import partial

import jax
import jax.numpy as jnp
import numpy as np
from jax import lax
from jax.experimental import pallas as pl
from jax.experimental.pallas import tpu as pltpu

_VMEM_LIMIT = 32 * 1024 * 1024  # raise further (<= physical VMEM) if tile_rows >= ~4K


def _round_up(x, m):
    return (x + m - 1) // m * m


# ----- Pass 1: fused temporal conv (one MXU matmul) -> per-channel partial sum / sumsq -----
def _stats_kernel(x_ref, w_ref, sum_ref, ssq_ref):
    # (tile_rows, Cpi) @ (Cpi, Cpo), f32 accumulation on the MXU.
    acc = jnp.dot(x_ref[...], w_ref[...], preferred_element_type=jnp.float32)
    # Keep 8 sublane partials per tile (cheap layout-trivial reshape + VPU adds);
    # the wrapper finishes the reduction in f32.  Nothing large is written to HBM.
    a3 = acc.reshape(-1, 8, acc.shape[-1])
    sum_ref[...] = jnp.sum(a3, axis=0)[None]
    ssq_ref[...] = jnp.sum(a3 * a3, axis=0)[None]


# ----- Pass 2: recompute conv, apply fused BN affine, lane-dense store -----
def _conv_bn_kernel(x_ref, w_ref, scale_ref, shift_ref, o_ref):
    acc = jnp.dot(x_ref[...], w_ref[...], preferred_element_type=jnp.float32)
    o_ref[...] = (acc * scale_ref[...] + shift_ref[...]).astype(o_ref.dtype)


def tcn_forward(x_nchw, weight, bias, gamma, beta, *, stride=1, eps=1e-5,
                tile_rows=2048, matmul_dtype=jnp.bfloat16,
                out_dtype=jnp.float32, channels_last_out=False):
    """x_nchw: (N, C_in, T, V); weight: (C_out, C_in, K, 1).

    Returns (N, C_out, T_out, V) by default; (N, T_out, V, C_out) if
    `channels_last_out=True` (avoids a full extra HBM pass for the transpose).
    `out_dtype=jnp.bfloat16` halves the dominant store traffic if the consumer
    accepts bf16.
    """
    del bias  # cancelled exactly by training-mode BN mean subtraction (init is 0 anyway)

    N, C_in, T, V = x_nchw.shape
    C_out, _, K, _ = weight.shape
    pad = (K - 1) // 2
    T_out = (T + 2 * pad - K) // stride + 1
    rows = N * T_out * V

    c_in_flat = K * C_in
    Cpi = _round_up(max(c_in_flat, 128), 128)   # lane-dense contraction dim
    Cpo = _round_up(max(C_out, 128), 128)       # lane-dense output dim

    # Tile sizing: as large as requested but never (much) beyond the problem,
    # and a multiple of 8 for sublane-aligned blocks.  (Pass 1 / pass 2 could be
    # tuned independently; a single tile keeps the padded row count shared.)
    tile_rows = _round_up(max(8, min(tile_rows, _round_up(rows, 8))), 8)
    rows_pad = _round_up(rows, tile_rows)
    n_tiles = rows_pad // tile_rows

    # Channels-last, zero-pad T, build the im2col slab (rows, K*C_in) directly in
    # bf16 (building it in f32 and casting at the end doubles wrapper HBM bytes).
    x = jnp.transpose(x_nchw, (0, 2, 3, 1)).astype(matmul_dtype)         # (N, T, V, C_in)
    x = jnp.pad(x, ((0, 0), (pad, pad), (0, 0), (0, 0)))                 # (N, T+2p, V, C_in)
    taps = [x[:, k:k + (T_out - 1) * stride + 1:stride] for k in range(K)]
    xcol = jnp.concatenate(taps, axis=-1).reshape(rows, c_in_flat)       # (rows, K*C_in)
    xcol = jnp.pad(xcol, ((0, rows_pad - rows), (0, Cpi - c_in_flat)))

    # Weight (C_out, C_in, K, 1) -> (K*C_in, C_out), tap-major, zero-padded, bf16.
    w = jnp.transpose(weight[..., 0], (2, 1, 0)).reshape(c_in_flat, C_out).astype(jnp.float32)
    w = jnp.pad(w, ((0, Cpi - c_in_flat), (0, Cpo - C_out))).astype(matmul_dtype)

    gamma_p = jnp.pad(gamma.astype(jnp.float32), (0, Cpo - C_out))
    beta_p = jnp.pad(beta.astype(jnp.float32), (0, Cpo - C_out))

    # ---- Pass 1: batch statistics only (per-tile partials -> fully parallel grid) ----
    psum, pssq = pl.pallas_call(
        _stats_kernel,
        out_shape=(jax.ShapeDtypeStruct((n_tiles, 8, Cpo), jnp.float32),
                   jax.ShapeDtypeStruct((n_tiles, 8, Cpo), jnp.float32)),
        grid_spec=pltpu.PrefetchScalarGridSpec(
            num_scalar_prefetch=0,
            grid=(n_tiles,),
            in_specs=[pl.BlockSpec((tile_rows, Cpi), lambda i: (i, 0)),
                      pl.BlockSpec((Cpi, Cpo), lambda i: (0, 0))],
            out_specs=(pl.BlockSpec((1, 8, Cpo), lambda i: (i, 0, 0)),
                       pl.BlockSpec((1, 8, Cpo), lambda i: (i, 0, 0)))),
        compiler_params=pltpu.CompilerParams(
            dimension_semantics=("parallel",),      # distinct output block per tile
            vmem_limit_bytes=_VMEM_LIMIT),
    )(xcol, w)

    # Tiny per-channel math in f32 (zero-padded rows contribute 0 to both sums;
    # division uses the true row count).
    count = jnp.float32(rows)
    csum = jnp.sum(psum, axis=(0, 1))               # (Cpo,)
    cssq = jnp.sum(pssq, axis=(0, 1))
    mean = csum / count
    var = jnp.maximum(cssq / count - mean * mean, 0.0)   # biased var, clamped (cancellation guard)
    inv = lax.rsqrt(var + eps)
    scale = (inv * gamma_p).reshape(1, Cpo)
    shift = (beta_p - mean * inv * gamma_p).reshape(1, Cpo)

    # ---- Pass 2: recompute conv + fused BN affine, write y once (no f32 intermediate) ----
    y = pl.pallas_call(
        _conv_bn_kernel,
        out_shape=jax.ShapeDtypeStruct((rows_pad, Cpo), out_dtype),
        grid_spec=pltpu.PrefetchScalarGridSpec(
            num_scalar_prefetch=0,
            grid=(n_tiles,),
            in_specs=[pl.BlockSpec((tile_rows, Cpi), lambda i: (i, 0)),
                      pl.BlockSpec((Cpi, Cpo), lambda i: (0, 0)),
                      pl.BlockSpec((1, Cpo), lambda i: (0, 0)),
                      pl.BlockSpec((1, Cpo), lambda i: (0, 0))],
            out_specs=pl.BlockSpec((tile_rows, Cpo), lambda i: (i, 0))),
        compiler_params=pltpu.CompilerParams(
            dimension_semantics=("parallel",),
            vmem_limit_bytes=_VMEM_LIMIT),
    )(xcol, w, scale, shift)

    y = y[:rows, :C_out].reshape(N, T_out, V, C_out)
    if channels_last_out:
        return y                                    # NHWC: skips a full HBM transpose pass
    return jnp.transpose(y, (0, 3, 1, 2))           # NCHW for exact module parity


def reference_forward(x_nchw, weight, bias, gamma, beta, *, stride=1, eps=1e-5):
    """Pure-JAX reference (conv + training-mode BN) for correctness check."""
    pad = int((weight.shape[2] - 1) / 2)
    y = lax.conv_general_dilated(
        x_nchw.astype(jnp.float32), weight.astype(jnp.float32),
        window_strides=(stride, 1),
        padding=((pad, pad), (0, 0)),
        dimension_numbers=("NCHW", "OIHW", "NCHW"),
    ) + bias.reshape(1, -1, 1, 1)
    mean = jnp.mean(y, axis=(0, 2, 3), keepdims=True)
    var = jnp.mean((y - mean) ** 2, axis=(0, 2, 3), keepdims=True)
    return (y - mean) * lax.rsqrt(var + eps) * gamma.reshape(1, -1, 1, 1) \
        + beta.reshape(1, -1, 1, 1)


if __name__ == "__main__":
    # Small shapes consistent with the module (NCHW = (N, C_in, T, V)).
    N, C_in, C_out, T, V = 2, 4, 8, 16, 16
    K, stride = 9, 1

    key = jax.random.PRNGKey(0)
    kx, kw = jax.random.split(key)

    # conv_init: kaiming_normal(mode='fan_out') -> std = sqrt(2 / (C_out*K*1)), bias = 0
    # bn_init: weight = 1, bias = 0
    fan_out = C_out * K * 1
    w_std = float(np.sqrt(2.0 / fan_out))
    weight = jax.random.normal(kw, (C_out, C_in, K, 1), dtype=jnp.float32) * w_std
    bias = jnp.zeros((C_out,), dtype=jnp.float32)
    gamma = jnp.ones((C_out,), dtype=jnp.float32)
    beta = jnp.zeros((C_out,), dtype=jnp.float32)

    x = jax.random.normal(kx, (N, C_in, T, V), dtype=jnp.float32)

    fwd = jax.jit(partial(tcn_forward, stride=stride))
    out = jax.block_until_ready(fwd(x, weight, bias, gamma, beta))

    # Reference uses bf16-rounded matmul inputs (matching the MXU input precision,
    # a deliberate precision/perf tradeoff), with all accumulation / BN stats in f32.
    x_r = x.astype(jnp.bfloat16).astype(jnp.float32)
    w_r = weight.astype(jnp.bfloat16).astype(jnp.float32)
    ref = jax.block_until_ready(
        reference_forward(x_r, w_r, bias, gamma, beta, stride=stride))
    np.testing.assert_allclose(np.asarray(out), np.asarray(ref), rtol=5e-3, atol=5e-3)

    print("KERNEL_OK")
</pallas_src>

<mosaic_0001>
module attributes {stable_mosaic.version = 11 : i64} {
  func.func @_stats_kernel(%arg0: i32, %arg1: memref<512x128xbf16, #tpu.memory_space<vmem>>, %arg2: memref<128x128xbf16, #tpu.memory_space<vmem>>, %arg3: memref<1x8x128xf32, #tpu.memory_space<vmem>>, %arg4: memref<1x8x128xf32, #tpu.memory_space<vmem>>) attributes {dimension_semantics = [#tpu.dimension_semantics<parallel>], iteration_bounds = array<i64: 1>, scalar_prefetch = 0 : i64, scratch_operands = 0 : i64, tpu.core_type = #tpu.core_type<tc>, window_params = [{transform_indices = @transform_0, window_bounds = array<i64: 512, 128>}, {pipeline_mode = #tpu.pipeline_mode<synchronous>, transform_indices = @transform_1, window_bounds = array<i64: 128, 128>}, {transform_indices = @transform_2, window_bounds = array<i64: 1, 8, 128>}, {transform_indices = @transform_3, window_bounds = array<i64: 1, 8, 128>}]} {
    %c0 = arith.constant 0 : index
    %c0_0 = arith.constant 0 : index
    %0 = vector.load %arg1[%c0, %c0_0] : memref<512x128xbf16, #tpu.memory_space<vmem>>, vector<512x128xbf16>
    %c0_1 = arith.constant 0 : index
    %c0_2 = arith.constant 0 : index
    %1 = vector.load %arg2[%c0_1, %c0_2] : memref<128x128xbf16, #tpu.memory_space<vmem>>, vector<128x128xbf16>
    %cst = arith.constant dense<0.000000e+00> : vector<512x128xf32>
    %2 = tpu.matmul %0, %1, %cst {dimension_numbers = #tpu.dot_dimension_numbers<[1], [0], [0], [1], [0, 0, 1, 1], [], []>} : vector<512x128xbf16>, vector<128x128xbf16>, vector<512x128xf32> -> vector<512x128xf32>
    %3 = vector.shape_cast %2 : vector<512x128xf32> to vector<64x8x128xf32>
    %cst_3 = arith.constant dense<0.000000e+00> : vector<8x128xf32>
    %4 = vector.multi_reduction <add>, %3, %cst_3 [0] : vector<64x8x128xf32> to vector<8x128xf32>
    %5 = vector.shape_cast %4 : vector<8x128xf32> to vector<1x8x128xf32>
    %c0_4 = arith.constant 0 : index
    %c0_5 = arith.constant 0 : index
    %c0_6 = arith.constant 0 : index
    %6 = vector.load %arg3[%c0_4, %c0_5, %c0_6] : memref<1x8x128xf32, #tpu.memory_space<vmem>>, vector<1x8x128xf32>
    tpu.vector_store %arg3[%c0_4, %c0_5, %c0_6], %5 {strides = array<i32>} : memref<1x8x128xf32, #tpu.memory_space<vmem>>, vector<1x8x128xf32>,
    %7 = arith.mulf %3, %3 : vector<64x8x128xf32>
    %cst_7 = arith.constant dense<0.000000e+00> : vector<8x128xf32>
    %8 = vector.multi_reduction <add>, %7, %cst_7 [0] : vector<64x8x128xf32> to vector<8x128xf32>
    %9 = vector.shape_cast %8 : vector<8x128xf32> to vector<1x8x128xf32>
    %c0_8 = arith.constant 0 : index
    %c0_9 = arith.constant 0 : index
    %c0_10 = arith.constant 0 : index
    %10 = vector.load %arg4[%c0_8, %c0_9, %c0_10] : memref<1x8x128xf32, #tpu.memory_space<vmem>>, vector<1x8x128xf32>
    tpu.vector_store %arg4[%c0_8, %c0_9, %c0_10], %9 {strides = array<i32>} : memref<1x8x128xf32, #tpu.memory_space<vmem>>, vector<1x8x128xf32>,
    return
  }
  func.func @transform_0(%arg0: i32) -> (i32, i32) {
    %c0_i32 = arith.constant 0 : i32
    %c0_i32_0 = arith.constant 0 : i32
    return %arg0, %c0_i32 : i32, i32
  }
  func.func @transform_1(%arg0: i32) -> (i32, i32) {
    %c0_i32 = arith.constant 0 : i32
    %c0_i32_0 = arith.constant 0 : i32
    %c0_i32_1 = arith.constant 0 : i32
    return %c0_i32, %c0_i32_0 : i32, i32
  }
  func.func @transform_2(%arg0: i32) -> (i32, i32, i32) {
    %c0_i32 = arith.constant 0 : i32
    %c0_i32_0 = arith.constant 0 : i32
    %c0_i32_1 = arith.constant 0 : i32
    return %arg0, %c0_i32, %c0_i32_0 : i32, i32, i32
  }
  func.func @transform_3(%arg0: i32) -> (i32, i32, i32) {
    %c0_i32 = arith.constant 0 : i32
    %c0_i32_0 = arith.constant 0 : i32
    %c0_i32_1 = arith.constant 0 : i32
    return %arg0, %c0_i32, %c0_i32_0 : i32, i32, i32
  }
}

module attributes {stable_mosaic.version = 11 : i64} {
  func.func @_conv_bn_kernel(%arg0: i32, %arg1: memref<512x128xbf16, #tpu.memory_space<vmem>>, %arg2: memref<128x128xbf16, #tpu.memory_space<vmem>>, %arg3: memref<1x128xf32, #tpu.memory_space<vmem>>, %arg4: memref<1x128xf32, #tpu.memory_space<vmem>>, %arg5: memref<512x128xf32, #tpu.memory_space<vmem>>) attributes {dimension_semantics = [#tpu.dimension_semantics<parallel>], iteration_bounds = array<i64: 1>, scalar_prefetch = 0 : i64, scratch_operands = 0 : i64, tpu.core_type = #tpu.core_type<tc>, window_params = [{transform_indices = @transform_0, window_bounds = array<i64: 512, 128>}, {pipeline_mode = #tpu.pipeline_mode<synchronous>, transform_indices = @transform_1, window_bounds = array<i64: 128, 128>}, {pipeline_mode = #tpu.pipeline_mode<synchronous>, transform_indices = @transform_2, window_bounds = array<i64: 1, 128>}, {pipeline_mode = #tpu.pipeline_mode<synchronous>, transform_indices = @transform_3, window_bounds = array<i64: 1, 128>}, {transform_indices = @transform_4, window_bounds = array<i64: 512, 128>}]} {
    %c0 = arith.constant 0 : index
    %c0_0 = arith.constant 0 : index
    %0 = vector.load %arg1[%c0, %c0_0] : memref<512x128xbf16, #tpu.memory_space<vmem>>, vector<512x128xbf16>
    %c0_1 = arith.constant 0 : index
    %c0_2 = arith.constant 0 : index
    %1 = vector.load %arg2[%c0_1, %c0_2] : memref<128x128xbf16, #tpu.memory_space<vmem>>, vector<128x128xbf16>
    %cst = arith.constant dense<0.000000e+00> : vector<512x128xf32>
    %2 = tpu.matmul %0, %1, %cst {dimension_numbers = #tpu.dot_dimension_numbers<[1], [0], [0], [1], [0, 0, 1, 1], [], []>} : vector<512x128xbf16>, vector<128x128xbf16>, vector<512x128xf32> -> vector<512x128xf32>
    %c0_3 = arith.constant 0 : index
    %c0_4 = arith.constant 0 : index
    %3 = vector.load %arg3[%c0_3, %c0_4] : memref<1x128xf32, #tpu.memory_space<vmem>>, vector<1x128xf32>
    %4 = vector.broadcast %3 : vector<1x128xf32> to vector<512x128xf32>
    %5 = arith.mulf %2, %4 : vector<512x128xf32>
    %c0_5 = arith.constant 0 : index
    %c0_6 = arith.constant 0 : index
    %6 = vector.load %arg4[%c0_5, %c0_6] : memref<1x128xf32, #tpu.memory_space<vmem>>, vector<1x128xf32>
    %7 = vector.broadcast %6 : vector<1x128xf32> to vector<512x128xf32>
    %8 = arith.addf %5, %7 : vector<512x128xf32>
    %c0_7 = arith.constant 0 : index
    %c0_8 = arith.constant 0 : index
    %9 = vector.load %arg5[%c0_7, %c0_8] : memref<512x128xf32, #tpu.memory_space<vmem>>, vector<512x128xf32>
    tpu.vector_store %arg5[%c0_7, %c0_8], %8 {strides = array<i32>} : memref<512x128xf32, #tpu.memory_space<vmem>>, vector<512x128xf32>,
    return
  }
  func.func @transform_0(%arg0: i32) -> (i32, i32) {
    %c0_i32 = arith.constant 0 : i32
    %c0_i32_0 = arith.constant 0 : i32
    return %arg0, %c0_i32 : i32, i32
  }
  func.func @transform_1(%arg0: i32) -> (i32, i32) {
    %c0_i32 = arith.constant 0 : i32
    %c0_i32_0 = arith.constant 0 : i32
    %c0_i32_1 = arith.constant 0 : i32
    return %c0_i32, %c0_i32_0 : i32, i32
  }
  func.func @transform_2(%arg0: i32) -> (i32, i32) {
    %c0_i32 = arith.constant 0 : i32
    %c0_i32_0 = arith.constant 0 : i32
    %c0_i32_1 = arith.constant 0 : i32
    return %c0_i32, %c0_i32_0 : i32, i32
  }
  func.func @transform_3(%arg0: i32) -> (i32, i32) {
    %c0_i32 = arith.constant 0 : i32
    %c0_i32_0 = arith.constant 0 : i32
    %c0_i32_1 = arith.constant 0 : i32
    return %c0_i32, %c0_i32_0 : i32, i32
  }
  func.func @transform_4(%arg0: i32) -> (i32, i32) {
    %c0_i32 = arith.constant 0 : i32
    %c0_i32_0 = arith.constant 0 : i32
    return %arg0, %c0_i32 : i32, i32
  }
}

</mosaic_0001>

<llo_original>
// kernel: tcn_forward.3
$region0: #{tcn_forward.3}
  #allocation0 [shape = 'u32[]', space=smem, size = 0x4, offset = 0x4, fixed_abs, tag = 'smem constant byte address 0x4 - core index']
  #allocation1 [shape = 'u32[144,128]{1,0:T(1,128)}', space=vmem, size = 0x12000, scoped, tag = 'internal scratch']
  %s0 = inlined_call_operand.vmem [shape: bf16[512,128], index: 0, kind: input, shape index: {}]
  %s1 = inlined_call_operand.vmem [shape: bf16[128,128], index: 1, kind: input, shape index: {}]
  %s2 = inlined_call_operand.vmem [shape: f32[1,128], index: 2, kind: input, shape index: {}]
  %s3 = inlined_call_operand.vmem [shape: f32[1,128], index: 3, kind: input, shape index: {}]
  %s4 = inlined_call_operand.vmem [shape: f32[512,128], index: 4, kind: output, shape index: {}]
  %s5 = sld [smem:[#allocation0]]
  $region26: #{tcn_forward.3} parent=0
    _
  %s7 = ssub.s32 1, %s5
  %s8 = scalar_select 0, %s7, %s5
  // Predicated region
  $region2: #{tcn_forward.3} parent=0 // pred_check
    _
  $region3: #{tcn_forward.3} parent=0 // pred_check_branch
    %10 = sbr.rel (0) target = $region5
  $region4: #{tcn_forward.3} parent=0 // pred_region
    _
  $region5: #{tcn_forward.3} parent=0 // pred_fallthru
    _
  // Predicated region
  $region6: #{tcn_forward.3} parent=0 // pred_check
    _
  $region7: #{tcn_forward.3} parent=0 // pred_check_branch
    %12 = sbr.rel (0) target = $region9
  $region8: #{tcn_forward.3} parent=0 // pred_region
    _
  $region9: #{tcn_forward.3} parent=0 // pred_fallthru
    _
  // Predicated region
  $region10: #{tcn_forward.3} parent=0 // pred_check
    _
  $region11: #{tcn_forward.3} parent=0 // pred_check_branch
    %14 = sbr.rel (0) target = $region13
  $region12: #{tcn_forward.3} parent=0 // pred_region
    _
  $region13: #{tcn_forward.3} parent=0 // pred_fallthru
    _
  // Predicated region
  $region14: #{tcn_forward.3} parent=0 // pred_check
    _
  $region15: #{tcn_forward.3} parent=0 // pred_check_branch
    %16 = sbr.rel (0) target = $region17
  $region16: #{tcn_forward.3} parent=0 // pred_region
    _
  $region17: #{tcn_forward.3} parent=0 // pred_fallthru
    _
  %v18 = vld [vmem:[%s0] sm:$0xf]
  %v19 = vld [vmem:[%s0 + $0x4] sm:$0xf]
  %v20 = vld [vmem:[%s0 + $0x8] sm:$0xf]
  %v21 = vld [vmem:[%s0 + $0xc] sm:$0xf]
  %v22 = vld [vmem:[%s0 + $0x10] sm:$0xf]
  %v23 = vld [vmem:[%s0 + $0x14] sm:$0xf]
  %v24 = vld [vmem:[%s0 + $0x18] sm:$0xf]
  %v25 = vld [vmem:[%s0 + $0x1c] sm:$0xf]
  %v26 = vld [vmem:[%s0 + $0x20] sm:$0xf]
  %v27 = vld [vmem:[%s0 + $0x24] sm:$0xf]
  %v28 = vld [vmem:[%s0 + $0x28] sm:$0xf]
  %v29 = vld [vmem:[%s0 + $0x2c] sm:$0xf]
  %v30 = vld [vmem:[%s0 + $0x30] sm:$0xf]
  %v31 = vld [vmem:[%s0 + $0x34] sm:$0xf]
  %v32 = vld [vmem:[%s0 + $0x38] sm:$0xf]
  %v33 = vld [vmem:[%s0 + $0x3c] sm:$0xf]
  %v34 = vld [vmem:[%s0 + $0x40] sm:$0xf]
  %v35 = vld [vmem:[%s0 + $0x44] sm:$0xf]
  %v36 = vld [vmem:[%s0 + $0x48] sm:$0xf]
  %v37 = vld [vmem:[%s0 + $0x4c] sm:$0xf]
  %v38 = vld [vmem:[%s0 + $0x50] sm:$0xf]
  %v39 = vld [vmem:[%s0 + $0x54] sm:$0xf]
  %v40 = vld [vmem:[%s0 + $0x58] sm:$0xf]
  %v41 = vld [vmem:[%s0 + $0x5c] sm:$0xf]
  %v42 = vld [vmem:[%s0 + $0x60] sm:$0xf]
  %v43 = vld [vmem:[%s0 + $0x64] sm:$0xf]
  %v44 = vld [vmem:[%s0 + $0x68] sm:$0xf]
  %v45 = vld [vmem:[%s0 + $0x6c] sm:$0xf]
  %v46 = vld [vmem:[%s0 + $0x70] sm:$0xf]
  %v47 = vld [vmem:[%s0 + $0x74] sm:$0xf]
  %v48 = vld [vmem:[%s0 + $0x78] sm:$0xf]
  %v49 = vld [vmem:[%s0 + $0x7c] sm:$0xf]
  %v50 = vld [vmem:[%s0 + $0x80] sm:$0xf]
  %v51 = vld [vmem:[%s0 + $0x84] sm:$0xf]
  %v52 = vld [vmem:[%s0 + $0x88] sm:$0xf]
  %v53 = vld [vmem:[%s0 + $0x8c] sm:$0xf]
  %v54 = vld [vmem:[%s0 + $0x90] sm:$0xf]
  %v55 = vld [vmem:[%s0 + $0x94] sm:$0xf]
  %v56 = vld [vmem:[%s0 + $0x98] sm:$0xf]
  %v57 = vld [vmem:[%s0 + $0x9c] sm:$0xf]
  %v58 = vld [vmem:[%s0 + $0xa0] sm:$0xf]
  %v59 = vld [vmem:[%s0 + $0xa4] sm:$0xf]
  %v60 = vld [vmem:[%s0 + $0xa8] sm:$0xf]
  %v61 = vld [vmem:[%s0 + $0xac] sm:$0xf]
  %v62 = vld [vmem:[%s0 + $0xb0] sm:$0xf]
  %v63 = vld [vmem:[%s0 + $0xb4] sm:$0xf]
  %v64 = vld [vmem:[%s0 + $0xb8] sm:$0xf]
  %v65 = vld [vmem:[%s0 + $0xbc] sm:$0xf]
  %v66 = vld [vmem:[%s0 + $0xc0] sm:$0xf]
  %v67 = vld [vmem:[%s0 + $0xc4] sm:$0xf]
  %v68 = vld [vmem:[%s0 + $0xc8] sm:$0xf]
  %v69 = vld [vmem:[%s0 + $0xcc] sm:$0xf]
  %v70 = vld [vmem:[%s0 + $0xd0] sm:$0xf]
  %v71 = vld [vmem:[%s0 + $0xd4] sm:$0xf]
  %v72 = vld [vmem:[%s0 + $0xd8] sm:$0xf]
  %v73 = vld [vmem:[%s0 + $0xdc] sm:$0xf]
  %v74 = vld [vmem:[%s0 + $0xe0] sm:$0xf]
  %v75 = vld [vmem:[%s0 + $0xe4] sm:$0xf]
  %v76 = vld [vmem:[%s0 + $0xe8] sm:$0xf]
  %v77 = vld [vmem:[%s0 + $0xec] sm:$0xf]
  %v78 = vld [vmem:[%s0 + $0xf0] sm:$0xf]
  %v79 = vld [vmem:[%s0 + $0xf4] sm:$0xf]
  %v80 = vld [vmem:[%s0 + $0xf8] sm:$0xf]
  %v81 = vld [vmem:[%s0 + $0xfc] sm:$0xf]
  %v82 = vld [vmem:[%s1] sm:$0xf]
  %v83 = vld [vmem:[%s1 + $0x4] sm:$0xf]
  %v84 = vld [vmem:[%s1 + $0x8] sm:$0xf]
  %v85 = vld [vmem:[%s1 + $0xc] sm:$0xf]
  %v86 = vld [vmem:[%s1 + $0x10] sm:$0xf]
  %v87 = vld [vmem:[%s1 + $0x14] sm:$0xf]
  %v88 = vld [vmem:[%s1 + $0x18] sm:$0xf]
  %v89 = vld [vmem:[%s1 + $0x1c] sm:$0xf]
  %v90 = vld [vmem:[%s1 + $0x20] sm:$0xf]
  %v91 = vld [vmem:[%s1 + $0x24] sm:$0xf]
  %v92 = vld [vmem:[%s1 + $0x28] sm:$0xf]
  %v93 = vld [vmem:[%s1 + $0x2c] sm:$0xf]
  %v94 = vld [vmem:[%s1 + $0x30] sm:$0xf]
  %v95 = vld [vmem:[%s1 + $0x34] sm:$0xf]
  %v96 = vld [vmem:[%s1 + $0x38] sm:$0xf]
  %v97 = vld [vmem:[%s1 + $0x3c] sm:$0xf]
  %v162 = vunpack.c.l.b16 %v18
  %v163 = vunpack.c.l.b16 %v19
  %v164 = vunpack.c.l.b16 %v20
  %v165 = vunpack.c.l.b16 %v21
  %v166 = vunpack.c.l.b16 %v22
  %v167 = vunpack.c.l.b16 %v23
  %v168 = vunpack.c.l.b16 %v24
  %v169 = vunpack.c.l.b16 %v25
  %v170 = vunpack.c.l.b16 %v26
  %v171 = vunpack.c.l.b16 %v27
  %v172 = vunpack.c.l.b16 %v28
  %v173 = vunpack.c.l.b16 %v29
  %v174 = vunpack.c.l.b16 %v30
  %v175 = vunpack.c.l.b16 %v31
  %v176 = vunpack.c.l.b16 %v32
  %v177 = vunpack.c.l.b16 %v33
  %v178 = vunpack.c.l.b16 %v34
  %v179 = vunpack.c.l.b16 %v35
  %v180 = vunpack.c.l.b16 %v36
  %v181 = vunpack.c.l.b16 %v37
  %v182 = vunpack.c.l.b16 %v38
  %v183 = vunpack.c.l.b16 %v39
  %v184 = vunpack.c.l.b16 %v40
  %v185 = vunpack.c.l.b16 %v41
  %v186 = vunpack.c.l.b16 %v42
  %v187 = vunpack.c.l.b16 %v43
  %v188 = vunpack.c.l.b16 %v44
  %v189 = vunpack.c.l.b16 %v45
  %v190 = vunpack.c.l.b16 %v46
  %v191 = vunpack.c.l.b16 %v47
  %v192 = vunpack.c.l.b16 %v48
  %v193 = vunpack.c.l.b16 %v49
  %v194 = vunpack.c.l.b16 %v50
  %v195 = vunpack.c.l.b16 %v51
  %v196 = vunpack.c.l.b16 %v52
  %v197 = vunpack.c.l.b16 %v53
  %v198 = vunpack.c.l.b16 %v54
  %v199 = vunpack.c.l.b16 %v55
  %v200 = vunpack.c.l.b16 %v56
  %v201 = vunpack.c.l.b16 %v57
  %v202 = vunpack.c.l.b16 %v58
  %v203 = vunpack.c.l.b16 %v59
  %v204 = vunpack.c.l.b16 %v60
  %v205 = vunpack.c.l.b16 %v61
  %v206 = vunpack.c.l.b16 %v62
  %v207 = vunpack.c.l.b16 %v63
  %v208 = vunpack.c.l.b16 %v64
  %v209 = vunpack.c.l.b16 %v65
  %v210 = vunpack.c.l.b16 %v66
  %v211 = vunpack.c.l.b16 %v67
  %v212 = vunpack.c.l.b16 %v68
  %v213 = vunpack.c.l.b16 %v69
  %v214 = vunpack.c.l.b16 %v70
  %v215 = vunpack.c.l.b16 %v71
  %v216 = vunpack.c.l.b16 %v72
  %v217 = vunpack.c.l.b16 %v73
  %v218 = vunpack.c.l.b16 %v74
  %v219 = vunpack.c.l.b16 %v75
  %v220 = vunpack.c.l.b16 %v76
  %v221 = vunpack.c.l.b16 %v77
  %v222 = vunpack.c.l.b16 %v78
  %v223 = vunpack.c.l.b16 %v79
  %v224 = vunpack.c.l.b16 %v80
  %v225 = vunpack.c.l.b16 %v81
  %v226 = vpack.c.b16 %v163, %v162
  %v227 = vpack.c.b16 %v165, %v164
  %v228 = vpack.c.b16 %v167, %v166
  %v229 = vpack.c.b16 %v169, %v168
  %v230 = vpack.c.b16 %v171, %v170
  %v231 = vpack.c.b16 %v173, %v172
  %v232 = vpack.c.b16 %v175, %v174
  %v233 = vpack.c.b16 %v177, %v176
  %v234 = vpack.c.b16 %v179, %v178
  %v235 = vpack.c.b16 %v181, %v180
  %v236 = vpack.c.b16 %v183, %v182
  %v237 = vpack.c.b16 %v185, %v184
  %v238 = vpack.c.b16 %v187, %v186
  %v239 = vpack.c.b16 %v189, %v188
  %v240 = vpack.c.b16 %v191, %v190
  %v241 = vpack.c.b16 %v193, %v192
  %v242 = vpack.c.b16 %v195, %v194
  %v243 = vpack.c.b16 %v197, %v196
  %v244 = vpack.c.b16 %v199, %v198
  %v245 = vpack.c.b16 %v201, %v200
  %v246 = vpack.c.b16 %v203, %v202
  %v247 = vpack.c.b16 %v205, %v204
  %v248 = vpack.c.b16 %v207, %v206
  %v249 = vpack.c.b16 %v209, %v208
  %v250 = vpack.c.b16 %v211, %v210
  %v251 = vpack.c.b16 %v213, %v212
  %v252 = vpack.c.b16 %v215, %v214
  %v253 = vpack.c.b16 %v217, %v216
  %v254 = vpack.c.b16 %v219, %v218
  %v255 = vpack.c.b16 %v221, %v220
  %v256 = vpack.c.b16 %v223, %v222
  %v257 = vpack.c.b16 %v225, %v224
  %v306 = vunpack.c.l.b16 %v82
  %v307 = vunpack.c.l.b16 %v83
  %v308 = vunpack.c.l.b16 %v84
  %v309 = vunpack.c.l.b16 %v85
  %v310 = vunpack.c.l.b16 %v86
  %v311 = vunpack.c.l.b16 %v87
  %v312 = vunpack.c.l.b16 %v88
  %v313 = vunpack.c.l.b16 %v89
  %v314 = vunpack.c.l.b16 %v90
  %v315 = vunpack.c.l.b16 %v91
  %v316 = vunpack.c.l.b16 %v92
  %v317 = vunpack.c.l.b16 %v93
  %v318 = vunpack.c.l.b16 %v94
  %v319 = vunpack.c.l.b16 %v95
  %v320 = vunpack.c.l.b16 %v96
  %v321 = vunpack.c.l.b16 %v97
  %v322 = vpack.c.b16 %v307, %v306
  %v323 = vpack.c.b16 %v309, %v308
  %v324 = vpack.c.b16 %v311, %v310
  %v325 = vpack.c.b16 %v313, %v312
  %v326 = vpack.c.b16 %v315, %v314
  %v327 = vpack.c.b16 %v317, %v316
  %v328 = vpack.c.b16 %v319, %v318
  %v329 = vpack.c.b16 %v321, %v320
  %338 = vmatprep.subr.bf16.mxu0 0
  %339 = vmatpush1.bf16.msra.mxu0 %v322
  %340 = vmatprep.subr.bf16.mxu0 0
  %341 = vmatpush1.bf16.msra.mxu0 %v323
  %342 = vmatprep.subr.bf16.mxu0 0
  %343 = vmatpush1.bf16.msra.mxu0 %v324
  %344 = vmatprep.subr.bf16.mxu0 0
  %345 = vmatpush1.bf16.msra.mxu0 %v325
  %346 = vmatprep.subr.bf16.mxu0 0
  %347 = vmatpush1.bf16.msra.mxu0 %v326
  %348 = vmatprep.subr.bf16.mxu0 0
  %349 = vmatpush1.bf16.msra.mxu0 %v327
  %350 = vmatprep.subr.bf16.mxu0 0
  %351 = vmatpush1.bf16.msra.mxu0 %v328
  %352 = vmatprep.subr.bf16.mxu0 0
  %353 = vmatpush1.bf16.msra.mxu0 %v329
  %354 = vmatprep.subr.bf16.mxu0 0
  %355 = vmatpush1.bf16.msra.mxu0 0
  %356 = vmatprep.subr.bf16.mxu0 0
  %357 = vmatpush1.bf16.msra.mxu0 0
  %358 = vmatprep.subr.bf16.mxu0 0
  %359 = vmatpush1.bf16.msra.mxu0 0
  %360 = vmatprep.subr.bf16.mxu0 0
  %361 = vmatpush1.bf16.msra.mxu0 0
  %362 = vmatprep.subr.bf16.mxu0 0
  %363 = vmatpush1.bf16.msra.mxu0 0
  %364 = vmatprep.subr.bf16.mxu0 0
  %365 = vmatpush1.bf16.msra.mxu0 0
  %366 = vmatprep.subr.bf16.mxu0 0
  %367 = vmatpush1.bf16.msra.mxu0 0
  %368 = vmatprep.subr.bf16.mxu0 0
  %369 = vmatpush1.bf16.msra.mxu0 0
  %370 = vmatprep.mubr.bf16.mxu0 0
  %371 = vmatmul.mubr.bf16.gmra.mrb[0].mxu0 %v226
  %v372 = vpop.f32.mrb[0].mxu0
  %v373 = vadd.f32 0.0, %v372
  %v374 = vpop.f32.mrb[0].mxu0
  %v375 = vpop.f32.mrb[0].mxu0
  %v376 = vadd.f32 0.0, %v375
  %v377 = vpop.f32.mrb[0].mxu0
  %378 = vmatprep.mubr.bf16.mxu0 0
  %379 = vmatmul.mubr.bf16.gmra.mrb[0].mxu0 %v227
  %v380 = vpop.f32.mrb[0].mxu0
  %v381 = vadd.f32 0.0, %v380
  %v382 = vpop.f32.mrb[0].mxu0
  %v383 = vpop.f32.mrb[0].mxu0
  %v384 = vadd.f32 0.0, %v383
  %v385 = vpop.f32.mrb[0].mxu0
  %386 = vmatprep.mubr.bf16.mxu0 0
  %387 = vmatmul.mubr.bf16.gmra.mrb[0].mxu0 %v228
  %v388 = vpop.f32.mrb[0].mxu0
  %v389 = vadd.f32 0.0, %v388
  %v390 = vpop.f32.mrb[0].mxu0
  %v391 = vpop.f32.mrb[0].mxu0
  %v392 = vadd.f32 0.0, %v391
  %v393 = vpop.f32.mrb[0].mxu0
  %394 = vmatprep.mubr.bf16.mxu0 0
  %395 = vmatmul.mubr.bf16.gmra.mrb[0].mxu0 %v229
  %v396 = vpop.f32.mrb[0].mxu0
  %v397 = vadd.f32 0.0, %v396
  %v398 = vpop.f32.mrb[0].mxu0
  %v399 = vpop.f32.mrb[0].mxu0
  %v400 = vadd.f32 0.0, %v399
  %v401 = vpop.f32.mrb[0].mxu0
  %402 = vmatprep.mubr.bf16.mxu0 0
  %403 = vmatmul.mubr.bf16.gmra.mrb[0].mxu0 %v230
  %v404 = vpop.f32.mrb[0].mxu0
  %v405 = vadd.f32 0.0, %v404
  %v406 = vpop.f32.mrb[0].mxu0
  %v407 = vpop.f32.mrb[0].mxu0
  %v408 = vadd.f32 0.0, %v407
  %v409 = vpop.f32.mrb[0].mxu0
  %410 = vmatprep.mubr.bf16.mxu0 0
  %411 = vmatmul.mubr.bf16.gmra.mrb[0].mxu0 %v231
  %v412 = vpop.f32.mrb[0].mxu0
  %v413 = vadd.f32 0.0, %v412
  %v414 = vpop.f32.mrb[0].mxu0
  %v415 = vpop.f32.mrb[0].mxu0
  %v416 = vadd.f32 0.0, %v415
  %v417 = vpop.f32.mrb[0].mxu0
  %418 = vmatprep.mubr.bf16.mxu0 0
  %419 = vmatmul.mubr.bf16.gmra.mrb[0].mxu0 %v232
  %v420 = vpop.f32.mrb[0].mxu0
  %v421 = vadd.f32 0.0, %v420
  %v422 = vpop.f32.mrb[0].mxu0
  %v423 = vpop.f32.mrb[0].mxu0
  %v424 = vadd.f32 0.0, %v423
  %v425 = vpop.f32.mrb[0].mxu0
  %426 = vmatprep.mubr.bf16.mxu0 0
  %427 = vmatmul.mubr.bf16.gmra.mrb[0].mxu0 %v233
  %v428 = vpop.f32.mrb[0].mxu0
  %v429 = vadd.f32 0.0, %v428
  %v430 = vpop.f32.mrb[0].mxu0
  %v431 = vpop.f32.mrb[0].mxu0
  %v432 = vadd.f32 0.0, %v431
  %v433 = vpop.f32.mrb[0].mxu0
  %434 = vmatprep.mubr.bf16.mxu0 0
  %435 = vmatmul.mubr.bf16.gmra.mrb[0].mxu0 %v234
  %v436 = vpop.f32.mrb[0].mxu0
  %v437 = vadd.f32 0.0, %v436
  %v438 = vpop.f32.mrb[0].mxu0
  %v439 = vpop.f32.mrb[0].mxu0
  %v440 = vadd.f32 0.0, %v439
  %v441 = vpop.f32.mrb[0].mxu0
  %442 = vmatprep.mubr.bf16.mxu0 0
  %443 = vmatmul.mubr.bf16.gmra.mrb[0].mxu0 %v235
  %v444 = vpop.f32.mrb[0].mxu0
  %v445 = vadd.f32 0.0, %v444
  %v446 = vpop.f32.mrb[0].mxu0
  %v447 = vpop.f32.mrb[0].mxu0
  %v448 = vadd.f32 0.0, %v447
  %v449 = vpop.f32.mrb[0].mxu0
  %450 = vmatprep.mubr.bf16.mxu0 0
  %451 = vmatmul.mubr.bf16.gmra.mrb[0].mxu0 %v236
  %v452 = vpop.f32.mrb[0].mxu0
  %v453 = vadd.f32 0.0, %v452
  %v454 = vpop.f32.mrb[0].mxu0
  %v455 = vpop.f32.mrb[0].mxu0
  %v456 = vadd.f32 0.0, %v455
  %v457 = vpop.f32.mrb[0].mxu0
  %458 = vmatprep.mubr.bf16.mxu0 0
  %459 = vmatmul.mubr.bf16.gmra.mrb[0].mxu0 %v237
  %v460 = vpop.f32.mrb[0].mxu0
  %v461 = vadd.f32 0.0, %v460
  %v462 = vpop.f32.mrb[0].mxu0
  %v463 = vpop.f32.mrb[0].mxu0
  %v464 = vadd.f32 0.0, %v463
  %v465 = vpop.f32.mrb[0].mxu0
  %466 = vmatprep.mubr.bf16.mxu0 0
  %467 = vmatmul.mubr.bf16.gmra.mrb[0].mxu0 %v238
  %v468 = vpop.f32.mrb[0].mxu0
  %v469 = vadd.f32 0.0, %v468
  %v470 = vpop.f32.mrb[0].mxu0
  %v471 = vpop.f32.mrb[0].mxu0
  %v472 = vadd.f32 0.0, %v471
  %v473 = vpop.f32.mrb[0].mxu0
  %474 = vmatprep.mubr.bf16.mxu0 0
  %475 = vmatmul.mubr.bf16.gmra.mrb[0].mxu0 %v239
  %v476 = vpop.f32.mrb[0].mxu0
  %v477 = vadd.f32 0.0, %v476
  %v478 = vpop.f32.mrb[0].mxu0
  %v479 = vpop.f32.mrb[0].mxu0
  %v480 = vadd.f32 0.0, %v479
  %v481 = vpop.f32.mrb[0].mxu0
  %482 = vmatprep.mubr.bf16.mxu0 0
  %483 = vmatmul.mubr.bf16.gmra.mrb[0].mxu0 %v240
  %v484 = vpop.f32.mrb[0].mxu0
  %v485 = vadd.f32 0.0, %v484
  %v486 = vpop.f32.mrb[0].mxu0
  %v487 = vpop.f32.mrb[0].mxu0
  %v488 = vadd.f32 0.0, %v487
  %v489 = vpop.f32.mrb[0].mxu0
  %490 = vmatprep.mubr.bf16.mxu0 0
  %491 = vmatmul.mubr.bf16.gmra.mrb[0].mxu0 %v241
  %v492 = vpop.f32.mrb[0].mxu0
  %v493 = vadd.f32 0.0, %v492
  %v494 = vpop.f32.mrb[0].mxu0
  %v495 = vpop.f32.mrb[0].mxu0
  %v496 = vadd.f32 0.0, %v495
  %v497 = vpop.f32.mrb[0].mxu0
  %498 = vmatprep.mubr.bf16.mxu0 0
  %499 = vmatmul.mubr.bf16.gmra.mrb[0].mxu0 %v242
  %v500 = vpop.f32.mrb[0].mxu0
  %v501 = vadd.f32 0.0, %v500
  %v502 = vpop.f32.mrb[0].mxu0
  %v503 = vpop.f32.mrb[0].mxu0
  %v504 = vadd.f32 0.0, %v503
  %v505 = vpop.f32.mrb[0].mxu0
  %506 = vmatprep.mubr.bf16.mxu0 0
  %507 = vmatmul.mubr.bf16.gmra.mrb[0].mxu0 %v243
  %v508 = vpop.f32.mrb[0].mxu0
  %v509 = vadd.f32 0.0, %v508
  %v510 = vpop.f32.mrb[0].mxu0
  %v511 = vpop.f32.mrb[0].mxu0
  %v512 = vadd.f32 0.0, %v511
  %v513 = vpop.f32.mrb[0].mxu0
  %514 = vmatprep.mubr.bf16.mxu0 0
  %515 = vmatmul.mubr.bf16.gmra.mrb[0].mxu0 %v244
  %v516 = vpop.f32.mrb[0].mxu0
  %v517 = vadd.f32 0.0, %v516
  %v518 = vpop.f32.mrb[0].mxu0
  %v519 = vpop.f32.mrb[0].mxu0
  %v520 = vadd.f32 0.0, %v519
  %v521 = vpop.f32.mrb[0].mxu0
  %522 = vmatprep.mubr.bf16.mxu0 0
  %523 = vmatmul.mubr.bf16.gmra.mrb[0].mxu0 %v245
  %v524 = vpop.f32.mrb[0].mxu0
  %v525 = vadd.f32 0.0, %v524
  %v526 = vpop.f32.mrb[0].mxu0
  %v527 = vpop.f32.mrb[0].mxu0
  %v528 = vadd.f32 0.0, %v527
  %v529 = vpop.f32.mrb[0].mxu0
  %530 = vmatprep.mubr.bf16.mxu0 0
  %531 = vmatmul.mubr.bf16.gmra.mrb[0].mxu0 %v246
  %v532 = vpop.f32.mrb[0].mxu0
  %v533 = vadd.f32 0.0, %v532
  %v534 = vpop.f32.mrb[0].mxu0
  %v535 = vpop.f32.mrb[0].mxu0
  %v536 = vadd.f32 0.0, %v535
  %v537 = vpop.f32.mrb[0].mxu0
  %538 = vmatprep.mubr.bf16.mxu0 0
  %539 = vmatmul.mubr.bf16.gmra.mrb[0].mxu0 %v247
  %v540 = vpop.f32.mrb[0].mxu0
  %v541 = vadd.f32 0.0, %v540
  %v542 = vpop.f32.mrb[0].mxu0
  %v543 = vpop.f32.mrb[0].mxu0
  %v544 = vadd.f32 0.0, %v543
  %v545 = vpop.f32.mrb[0].mxu0
  %546 = vmatprep.mubr.bf16.mxu0 0
  %547 = vmatmul.mubr.bf16.gmra.mrb[0].mxu0 %v248
  %v548 = vpop.f32.mrb[0].mxu0
  %v549 = vadd.f32 0.0, %v548
  %v550 = vpop.f32.mrb[0].mxu0
  %v551 = vpop.f32.mrb[0].mxu0
  %v552 = vadd.f32 0.0, %v551
  %v553 = vpop.f32.mrb[0].mxu0
  %554 = vmatprep.mubr.bf16.mxu0 0
  %555 = vmatmul.mubr.bf16.gmra.mrb[0].mxu0 %v249
  %v556 = vpop.f32.mrb[0].mxu0
  %v557 = vadd.f32 0.0, %v556
  %v558 = vpop.f32.mrb[0].mxu0
  %v559 = vpop.f32.mrb[0].mxu0
  %v560 = vadd.f32 0.0, %v559
  %v561 = vpop.f32.mrb[0].mxu0
  %562 = vmatprep.mubr.bf16.mxu0 0
  %563 = vmatmul.mubr.bf16.gmra.mrb[0].mxu0 %v250
  %v564 = vpop.f32.mrb[0].mxu0
  %v565 = vadd.f32 0.0, %v564
  %v566 = vpop.f32.mrb[0].mxu0
  %v567 = vpop.f32.mrb[0].mxu0
  %v568 = vadd.f32 0.0, %v567
  %v569 = vpop.f32.mrb[0].mxu0
  %570 = vmatprep.mubr.bf16.mxu0 0
  %571 = vmatmul.mubr.bf16.gmra.mrb[0].mxu0 %v251
  %v572 = vpop.f32.mrb[0].mxu0
  %v573 = vadd.f32 0.0, %v572
  %v574 = vpop.f32.mrb[0].mxu0
  %v575 = vpop.f32.mrb[0].mxu0
  %v576 = vadd.f32 0.0, %v575
  %v577 = vpop.f32.mrb[0].mxu0
  %578 = vmatprep.mubr.bf16.mxu0 0
  %579 = vmatmul.mubr.bf16.gmra.mrb[0].mxu0 %v252
  %v580 = vpop.f32.mrb[0].mxu0
  %v581 = vadd.f32 0.0, %v580
  %v582 = vpop.f32.mrb[0].mxu0
  %v583 = vpop.f32.mrb[0].mxu0
  %v584 = vadd.f32 0.0, %v583
  %v585 = vpop.f32.mrb[0].mxu0
  %586 = vmatprep.mubr.bf16.mxu0 0
  %587 = vmatmul.mubr.bf16.gmra.mrb[0].mxu0 %v253
  %v588 = vpop.f32.mrb[0].mxu0
  %v589 = vadd.f32 0.0, %v588
  %v590 = vpop.f32.mrb[0].mxu0
  %v591 = vpop.f32.mrb[0].mxu0
  %v592 = vadd.f32 0.0, %v591
  %v593 = vpop.f32.mrb[0].mxu0
  %594 = vmatprep.mubr.bf16.mxu0 0
  %595 = vmatmul.mubr.bf16.gmra.mrb[0].mxu0 %v254
  %v596 = vpop.f32.mrb[0].mxu0
  %v597 = vadd.f32 0.0, %v596
  %v598 = vpop.f32.mrb[0].mxu0
  %v599 = vpop.f32.mrb[0].mxu0
  %v600 = vadd.f32 0.0, %v599
  %v601 = vpop.f32.mrb[0].mxu0
  %602 = vmatprep.mubr.bf16.mxu0 0
  %603 = vmatmul.mubr.bf16.gmra.mrb[0].mxu0 %v255
  %v604 = vpop.f32.mrb[0].mxu0
  %v605 = vadd.f32 0.0, %v604
  %v606 = vpop.f32.mrb[0].mxu0
  %v607 = vpop.f32.mrb[0].mxu0
  %v608 = vadd.f32 0.0, %v607
  %v609 = vpop.f32.mrb[0].mxu0
  %610 = vmatprep.mubr.bf16.mxu0 0
  %611 = vmatmul.mubr.bf16.gmra.mrb[0].mxu0 %v256
  %v612 = vpop.f32.mrb[0].mxu0
  %v613 = vadd.f32 0.0, %v612
  %v614 = vpop.f32.mrb[0].mxu0
  %v615 = vpop.f32.mrb[0].mxu0
  %v616 = vadd.f32 0.0, %v615
  %v617 = vpop.f32.mrb[0].mxu0
  %618 = vmatprep.mubr.bf16.mxu0 0
  %619 = vmatmul.mubr.bf16.gmra.mrb[0].mxu0 %v257
  %v620 = vpop.f32.mrb[0].mxu0
  %v621 = vadd.f32 0.0, %v620
  %v622 = vpop.f32.mrb[0].mxu0
  %v623 = vpop.f32.mrb[0].mxu0
  %v624 = vadd.f32 0.0, %v623
  %v625 = vpop.f32.mrb[0].mxu0
  %626 = vdwg.mxu0
  %v627 = vld [vmem:[%s2] sm:$0x1]
  %v629 = vlaneseq
  %v630 = vshrl.u32 %v629, 7
  %v631 = vsub.s32 0, %v630
  %v632 = vrot.slane %v627, %v631
  %v634 = vmul.f32 %v373, %v632
  %v635 = vmul.f32 %v376, %v632
  %v636 = vmul.f32 %v381, %v632
  %v637 = vmul.f32 %v384, %v632
  %v638 = vmul.f32 %v389, %v632
  %v639 = vmul.f32 %v392, %v632
  %v640 = vmul.f32 %v397, %v632
  %v641 = vmul.f32 %v400, %v632
  %v642 = vmul.f32 %v405, %v632
  %v643 = vmul.f32 %v408, %v632
  %v644 = vmul.f32 %v413, %v632
  %v645 = vmul.f32 %v416, %v632
  %v646 = vmul.f32 %v421, %v632
  %v647 = vmul.f32 %v424, %v632
  %v648 = vmul.f32 %v429, %v632
  %v649 = vmul.f32 %v432, %v632
  %v650 = vmul.f32 %v437, %v632
  %v651 = vmul.f32 %v440, %v632
  %v652 = vmul.f32 %v445, %v632
  %v653 = vmul.f32 %v448, %v632
  %v654 = vmul.f32 %v453, %v632
  %v655 = vmul.f32 %v456, %v632
  %v656 = vmul.f32 %v461, %v632
  %v657 = vmul.f32 %v464, %v632
  %v658 = vmul.f32 %v469, %v632
  %v659 = vmul.f32 %v472, %v632
  %v660 = vmul.f32 %v477, %v632
  %v661 = vmul.f32 %v480, %v632
  %v662 = vmul.f32 %v485, %v632
  %v663 = vmul.f32 %v488, %v632
  %v664 = vmul.f32 %v493, %v632
  %v665 = vmul.f32 %v496, %v632
  %v666 = vmul.f32 %v501, %v632
  %v667 = vmul.f32 %v504, %v632
  %v668 = vmul.f32 %v509, %v632
  %v669 = vmul.f32 %v512, %v632
  %v670 = vmul.f32 %v517, %v632
  %v671 = vmul.f32 %v520, %v632
  %v672 = vmul.f32 %v525, %v632
  %v673 = vmul.f32 %v528, %v632
  %v674 = vmul.f32 %v533, %v632
  %v675 = vmul.f32 %v536, %v632
  %v676 = vmul.f32 %v541, %v632
  %v677 = vmul.f32 %v544, %v632
  %v678 = vmul.f32 %v549, %v632
  %v679 = vmul.f32 %v552, %v632
  %v680 = vmul.f32 %v557, %v632
  %v681 = vmul.f32 %v560, %v632
  %v682 = vmul.f32 %v565, %v632
  %v683 = vmul.f32 %v568, %v632
  %v684 = vmul.f32 %v573, %v632
  %v685 = vmul.f32 %v576, %v632
  %v686 = vmul.f32 %v581, %v632
  %v687 = vmul.f32 %v584, %v632
  %v688 = vmul.f32 %v589, %v632
  %v689 = vmul.f32 %v592, %v632
  %v690 = vmul.f32 %v597, %v632
  %v691 = vmul.f32 %v600, %v632
  %v692 = vmul.f32 %v605, %v632
  %v693 = vmul.f32 %v608, %v632
  %v694 = vmul.f32 %v613, %v632
  %v695 = vmul.f32 %v616, %v632
  %v696 = vmul.f32 %v621, %v632
  %v697 = vmul.f32 %v624, %v632
  %v698 = vld [vmem:[%s3] sm:$0x1]
  %v700 = vlaneseq
  %v701 = vshrl.u32 %v700, 7
  %v702 = vsub.s32 0, %v701
  %v703 = vrot.slane %v698, %v702
  %v705 = vadd.f32 %v634, %v703
  %v706 = vadd.f32 %v635, %v703
  %v707 = vadd.f32 %v636, %v703
  %v708 = vadd.f32 %v637, %v703
  %v709 = vadd.f32 %v638, %v703
  %v710 = vadd.f32 %v639, %v703
  %v711 = vadd.f32 %v640, %v703
  %v712 = vadd.f32 %v641, %v703
  %v713 = vadd.f32 %v642, %v703
  %v714 = vadd.f32 %v643, %v703
  %v715 = vadd.f32 %v644, %v703
  %v716 = vadd.f32 %v645, %v703
  %v717 = vadd.f32 %v646, %v703
  %v718 = vadd.f32 %v647, %v703
  %v719 = vadd.f32 %v648, %v703
  %v720 = vadd.f32 %v649, %v703
  %v721 = vadd.f32 %v650, %v703
  %v722 = vadd.f32 %v651, %v703
  %v723 = vadd.f32 %v652, %v703
  %v724 = vadd.f32 %v653, %v703
  %v725 = vadd.f32 %v654, %v703
  %v726 = vadd.f32 %v655, %v703
  %v727 = vadd.f32 %v656, %v703
  %v728 = vadd.f32 %v657, %v703
  %v729 = vadd.f32 %v658, %v703
  %v730 = vadd.f32 %v659, %v703
  %v731 = vadd.f32 %v660, %v703
  %v732 = vadd.f32 %v661, %v703
  %v733 = vadd.f32 %v662, %v703
  %v734 = vadd.f32 %v663, %v703
  %v735 = vadd.f32 %v664, %v703
  %v736 = vadd.f32 %v665, %v703
  %v737 = vadd.f32 %v666, %v703
  %v738 = vadd.f32 %v667, %v703
  %v739 = vadd.f32 %v668, %v703
  %v740 = vadd.f32 %v669, %v703
  %v741 = vadd.f32 %v670, %v703
  %v742 = vadd.f32 %v671, %v703
  %v743 = vadd.f32 %v672, %v703
  %v744 = vadd.f32 %v673, %v703
  %v745 = vadd.f32 %v674, %v703
  %v746 = vadd.f32 %v675, %v703
  %v747 = vadd.f32 %v676, %v703
  %v748 = vadd.f32 %v677, %v703
  %v749 = vadd.f32 %v678, %v703
  %v750 = vadd.f32 %v679, %v703
  %v751 = vadd.f32 %v680, %v703
  %v752 = vadd.f32 %v681, %v703
  %v753 = vadd.f32 %v682, %v703
  %v754 = vadd.f32 %v683, %v703
  %v755 = vadd.f32 %v684, %v703
  %v756 = vadd.f32 %v685, %v703
  %v757 = vadd.f32 %v686, %v703
  %v758 = vadd.f32 %v687, %v703
  %v759 = vadd.f32 %v688, %v703
  %v760 = vadd.f32 %v689, %v703
  %v761 = vadd.f32 %v690, %v703
  %v762 = vadd.f32 %v691, %v703
  %v763 = vadd.f32 %v692, %v703
  %v764 = vadd.f32 %v693, %v703
  %v765 = vadd.f32 %v694, %v703
  %v766 = vadd.f32 %v695, %v703
  %v767 = vadd.f32 %v696, %v703
  %v768 = vadd.f32 %v697, %v703
  %769 = vst [vmem:[%s4] sm:$0xff] %v705
  %770 = vst [vmem:[%s4 + $0x8] sm:$0xff] %v706
  %771 = vst [vmem:[%s4 + $0x10] sm:$0xff] %v707
  %772 = vst [vmem:[%s4 + $0x18] sm:$0xff] %v708
  %773 = vst [vmem:[%s4 + $0x20] sm:$0xff] %v709
  %774 = vst [vmem:[%s4 + $0x28] sm:$0xff] %v710
  %775 = vst [vmem:[%s4 + $0x30] sm:$0xff] %v711
  %776 = vst [vmem:[%s4 + $0x38] sm:$0xff] %v712
  %777 = vst [vmem:[%s4 + $0x40] sm:$0xff] %v713
  %778 = vst [vmem:[%s4 + $0x48] sm:$0xff] %v714
  %779 = vst [vmem:[%s4 + $0x50] sm:$0xff] %v715
  %780 = vst [vmem:[%s4 + $0x58] sm:$0xff] %v716
  %781 = vst [vmem:[%s4 + $0x60] sm:$0xff] %v717
  %782 = vst [vmem:[%s4 + $0x68] sm:$0xff] %v718
  %783 = vst [vmem:[%s4 + $0x70] sm:$0xff] %v719
  %784 = vst [vmem:[%s4 + $0x78] sm:$0xff] %v720
  %785 = vst [vmem:[%s4 + $0x80] sm:$0xff] %v721
  %786 = vst [vmem:[%s4 + $0x88] sm:$0xff] %v722
  %787 = vst [vmem:[%s4 + $0x90] sm:$0xff] %v723
  %788 = vst [vmem:[%s4 + $0x98] sm:$0xff] %v724
  %789 = vst [vmem:[%s4 + $0xa0] sm:$0xff] %v725
  %790 = vst [vmem:[%s4 + $0xa8] sm:$0xff] %v726
  %791 = vst [vmem:[%s4 + $0xb0] sm:$0xff] %v727
  %792 = vst [vmem:[%s4 + $0xb8] sm:$0xff] %v728
  %793 = vst [vmem:[%s4 + $0xc0] sm:$0xff] %v729
  %794 = vst [vmem:[%s4 + $0xc8] sm:$0xff] %v730
  %795 = vst [vmem:[%s4 + $0xd0] sm:$0xff] %v731
  %796 = vst [vmem:[%s4 + $0xd8] sm:$0xff] %v732
  %797 = vst [vmem:[%s4 + $0xe0] sm:$0xff] %v733
  %798 = vst [vmem:[%s4 + $0xe8] sm:$0xff] %v734
  %799 = vst [vmem:[%s4 + $0xf0] sm:$0xff] %v735
  %800 = vst [vmem:[%s4 + $0xf8] sm:$0xff] %v736
  %801 = vst [vmem:[%s4 + $0x100] sm:$0xff] %v737
  %802 = vst [vmem:[%s4 + $0x108] sm:$0xff] %v738
  %803 = vst [vmem:[%s4 + $0x110] sm:$0xff] %v739
  %804 = vst [vmem:[%s4 + $0x118] sm:$0xff] %v740
  %805 = vst [vmem:[%s4 + $0x120] sm:$0xff] %v741
  %806 = vst [vmem:[%s4 + $0x128] sm:$0xff] %v742
  %807 = vst [vmem:[%s4 + $0x130] sm:$0xff] %v743
  %808 = vst [vmem:[%s4 + $0x138] sm:$0xff] %v744
  %809 = vst [vmem:[%s4 + $0x140] sm:$0xff] %v745
  %810 = vst [vmem:[%s4 + $0x148] sm:$0xff] %v746
  %811 = vst [vmem:[%s4 + $0x150] sm:$0xff] %v747
  %812 = vst [vmem:[%s4 + $0x158] sm:$0xff] %v748
  %813 = vst [vmem:[%s4 + $0x160] sm:$0xff] %v749
  %814 = vst [vmem:[%s4 + $0x168] sm:$0xff] %v750
  %815 = vst [vmem:[%s4 + $0x170] sm:$0xff] %v751
  %816 = vst [vmem:[%s4 + $0x178] sm:$0xff] %v752
  %817 = vst [vmem:[%s4 + $0x180] sm:$0xff] %v753
  %818 = vst [vmem:[%s4 + $0x188] sm:$0xff] %v754
  %819 = vst [vmem:[%s4 + $0x190] sm:$0xff] %v755
  %820 = vst [vmem:[%s4 + $0x198] sm:$0xff] %v756
  %821 = vst [vmem:[%s4 + $0x1a0] sm:$0xff] %v757
  %822 = vst [vmem:[%s4 + $0x1a8] sm:$0xff] %v758
  %823 = vst [vmem:[%s4 + $0x1b0] sm:$0xff] %v759
  %824 = vst [vmem:[%s4 + $0x1b8] sm:$0xff] %v760
  %825 = vst [vmem:[%s4 + $0x1c0] sm:$0xff] %v761
  %826 = vst [vmem:[%s4 + $0x1c8] sm:$0xff] %v762
  %827 = vst [vmem:[%s4 + $0x1d0] sm:$0xff] %v763
  %828 = vst [vmem:[%s4 + $0x1d8] sm:$0xff] %v764
  %829 = vst [vmem:[%s4 + $0x1e0] sm:$0xff] %v765
  %830 = vst [vmem:[%s4 + $0x1e8] sm:$0xff] %v766
  %831 = vst [vmem:[%s4 + $0x1f0] sm:$0xff] %v767
  %832 = vst [vmem:[%s4 + $0x1f8] sm:$0xff] %v768
  // Predicated region
  $region18: #{tcn_forward.3} parent=0 // pred_check
    _
  $region19: #{tcn_forward.3} parent=0 // pred_check_branch
    %834 = sbr.rel (0) target = $region21
  $region20: #{tcn_forward.3} parent=0 // pred_region
    _
  $region21: #{tcn_forward.3} parent=0 // pred_fallthru
    _
  // Predicated region
  $region22: #{tcn_forward.3} parent=0 // pred_check
    _
  $region23: #{tcn_forward.3} parent=0 // pred_check_branch
    %836 = sbr.rel (0) target = $region25
  $region24: #{tcn_forward.3} parent=0 // pred_region
    _
  $region25: #{tcn_forward.3} parent=0 // pred_fallthru
    _

// kernel: tcn_forward.2
$region0: #{tcn_forward.2}
  #allocation0 [shape = 'u32[]', space=smem, size = 0x4, offset = 0x4, fixed_abs, tag = 'smem constant byte address 0x4 - core index']
  #allocation1 [shape = 'u32[144,128]{1,0:T(1,128)}', space=vmem, size = 0x12000, scoped, tag = 'internal scratch']
  %s0 = inlined_call_operand.vmem [shape: bf16[512,128], index: 0, kind: input, shape index: {}]
  %s1 = inlined_call_operand.vmem [shape: bf16[128,128], index: 1, kind: input, shape index: {}]
  %s2 = inlined_call_operand.vmem [shape: f32[1,8,128], index: 2, kind: output, shape index: {0}]
  %s3 = inlined_call_operand.vmem [shape: f32[1,8,128], index: 3, kind: output, shape index: {1}]
  %4 = xla_tuple %s2, %s3
  %s5 = sld [smem:[#allocation0]]
  $region26: #{tcn_forward.2} parent=0
    _
  %s7 = ssub.s32 1, %s5
  %s8 = scalar_select 0, %s7, %s5
  // Predicated region
  $region2: #{tcn_forward.2} parent=0 // pred_check
    _
  $region3: #{tcn_forward.2} parent=0 // pred_check_branch
    %10 = sbr.rel (0) target = $region5
  $region4: #{tcn_forward.2} parent=0 // pred_region
    _
  $region5: #{tcn_forward.2} parent=0 // pred_fallthru
    _
  // Predicated region
  $region6: #{tcn_forward.2} parent=0 // pred_check
    _
  $region7: #{tcn_forward.2} parent=0 // pred_check_branch
    %12 = sbr.rel (0) target = $region9
  $region8: #{tcn_forward.2} parent=0 // pred_region
    _
  $region9: #{tcn_forward.2} parent=0 // pred_fallthru
    _
  %v14 = vld [vmem:[%s0] sm:$0xf]
  %v15 = vld [vmem:[%s0 + $0x4] sm:$0xf]
  %v16 = vld [vmem:[%s0 + $0x8] sm:$0xf]
  %v17 = vld [vmem:[%s0 + $0xc] sm:$0xf]
  %v18 = vld [vmem:[%s0 + $0x10] sm:$0xf]
  %v19 = vld [vmem:[%s0 + $0x14] sm:$0xf]
  %v20 = vld [vmem:[%s0 + $0x18] sm:$0xf]
  %v21 = vld [vmem:[%s0 + $0x1c] sm:$0xf]
  %v22 = vld [vmem:[%s0 + $0x20] sm:$0xf]
  %v23 = vld [vmem:[%s0 + $0x24] sm:$0xf]
  %v24 = vld [vmem:[%s0 + $0x28] sm:$0xf]
  %v25 = vld [vmem:[%s0 + $0x2c] sm:$0xf]
  %v26 = vld [vmem:[%s0 + $0x30] sm:$0xf]
  %v27 = vld [vmem:[%s0 + $0x34] sm:$0xf]
  %v28 = vld [vmem:[%s0 + $0x38] sm:$0xf]
  %v29 = vld [vmem:[%s0 + $0x3c] sm:$0xf]
  %v30 = vld [vmem:[%s0 + $0x40] sm:$0xf]
  %v31 = vld [vmem:[%s0 + $0x44] sm:$0xf]
  %v32 = vld [vmem:[%s0 + $0x48] sm:$0xf]
  %v33 = vld [vmem:[%s0 + $0x4c] sm:$0xf]
  %v34 = vld [vmem:[%s0 + $0x50] sm:$0xf]
  %v35 = vld [vmem:[%s0 + $0x54] sm:$0xf]
  %v36 = vld [vmem:[%s0 + $0x58] sm:$0xf]
  %v37 = vld [vmem:[%s0 + $0x5c] sm:$0xf]
  %v38 = vld [vmem:[%s0 + $0x60] sm:$0xf]
  %v39 = vld [vmem:[%s0 + $0x64] sm:$0xf]
  %v40 = vld [vmem:[%s0 + $0x68] sm:$0xf]
  %v41 = vld [vmem:[%s0 + $0x6c] sm:$0xf]
  %v42 = vld [vmem:[%s0 + $0x70] sm:$0xf]
  %v43 = vld [vmem:[%s0 + $0x74] sm:$0xf]
  %v44 = vld [vmem:[%s0 + $0x78] sm:$0xf]
  %v45 = vld [vmem:[%s0 + $0x7c] sm:$0xf]
  %v46 = vld [vmem:[%s0 + $0x80] sm:$0xf]
  %v47 = vld [vmem:[%s0 + $0x84] sm:$0xf]
  %v48 = vld [vmem:[%s0 + $0x88] sm:$0xf]
  %v49 = vld [vmem:[%s0 + $0x8c] sm:$0xf]
  %v50 = vld [vmem:[%s0 + $0x90] sm:$0xf]
  %v51 = vld [vmem:[%s0 + $0x94] sm:$0xf]
  %v52 = vld [vmem:[%s0 + $0x98] sm:$0xf]
  %v53 = vld [vmem:[%s0 + $0x9c] sm:$0xf]
  %v54 = vld [vmem:[%s0 + $0xa0] sm:$0xf]
  %v55 = vld [vmem:[%s0 + $0xa4] sm:$0xf]
  %v56 = vld [vmem:[%s0 + $0xa8] sm:$0xf]
  %v57 = vld [vmem:[%s0 + $0xac] sm:$0xf]
  %v58 = vld [vmem:[%s0 + $0xb0] sm:$0xf]
  %v59 = vld [vmem:[%s0 + $0xb4] sm:$0xf]
  %v60 = vld [vmem:[%s0 + $0xb8] sm:$0xf]
  %v61 = vld [vmem:[%s0 + $0xbc] sm:$0xf]
  %v62 = vld [vmem:[%s0 + $0xc0] sm:$0xf]
  %v63 = vld [vmem:[%s0 + $0xc4] sm:$0xf]
  %v64 = vld [vmem:[%s0 + $0xc8] sm:$0xf]
  %v65 = vld [vmem:[%s0 + $0xcc] sm:$0xf]
  %v66 = vld [vmem:[%s0 + $0xd0] sm:$0xf]
  %v67 = vld [vmem:[%s0 + $0xd4] sm:$0xf]
  %v68 = vld [vmem:[%s0 + $0xd8] sm:$0xf]
  %v69 = vld [vmem:[%s0 + $0xdc] sm:$0xf]
  %v70 = vld [vmem:[%s0 + $0xe0] sm:$0xf]
  %v71 = vld [vmem:[%s0 + $0xe4] sm:$0xf]
  %v72 = vld [vmem:[%s0 + $0xe8] sm:$0xf]
  %v73 = vld [vmem:[%s0 + $0xec] sm:$0xf]
  %v74 = vld [vmem:[%s0 + $0xf0] sm:$0xf]
  %v75 = vld [vmem:[%s0 + $0xf4] sm:$0xf]
  %v76 = vld [vmem:[%s0 + $0xf8] sm:$0xf]
  %v77 = vld [vmem:[%s0 + $0xfc] sm:$0xf]
  %v78 = vld [vmem:[%s1] sm:$0xf]
  %v79 = vld [vmem:[%s1 + $0x4] sm:$0xf]
  %v80 = vld [vmem:[%s1 + $0x8] sm:$0xf]
  %v81 = vld [vmem:[%s1 + $0xc] sm:$0xf]
  %v82 = vld [vmem:[%s1 + $0x10] sm:$0xf]
  %v83 = vld [vmem:[%s1 + $0x14] sm:$0xf]
  %v84 = vld [vmem:[%s1 + $0x18] sm:$0xf]
  %v85 = vld [vmem:[%s1 + $0x1c] sm:$0xf]
  %v86 = vld [vmem:[%s1 + $0x20] sm:$0xf]
  %v87 = vld [vmem:[%s1 + $0x24] sm:$0xf]
  %v88 = vld [vmem:[%s1 + $0x28] sm:$0xf]
  %v89 = vld [vmem:[%s1 + $0x2c] sm:$0xf]
  %v90 = vld [vmem:[%s1 + $0x30] sm:$0xf]
  %v91 = vld [vmem:[%s1 + $0x34] sm:$0xf]
  %v92 = vld [vmem:[%s1 + $0x38] sm:$0xf]
  %v93 = vld [vmem:[%s1 + $0x3c] sm:$0xf]
  %v158 = vunpack.c.l.b16 %v14
  %v159 = vunpack.c.l.b16 %v15
  %v160 = vunpack.c.l.b16 %v16
  %v161 = vunpack.c.l.b16 %v17
  %v162 = vunpack.c.l.b16 %v18
  %v163 = vunpack.c.l.b16 %v19
  %v164 = vunpack.c.l.b16 %v20
  %v165 = vunpack.c.l.b16 %v21
  %v166 = vunpack.c.l.b16 %v22
  %v167 = vunpack.c.l.b16 %v23
  %v168 = vunpack.c.l.b16 %v24
  %v169 = vunpack.c.l.b16 %v25
  %v170 = vunpack.c.l.b16 %v26
  %v171 = vunpack.c.l.b16 %v27
  %v172 = vunpack.c.l.b16 %v28
  %v173 = vunpack.c.l.b16 %v29
  %v174 = vunpack.c.l.b16 %v30
  %v175 = vunpack.c.l.b16 %v31
  %v176 = vunpack.c.l.b16 %v32
  %v177 = vunpack.c.l.b16 %v33
  %v178 = vunpack.c.l.b16 %v34
  %v179 = vunpack.c.l.b16 %v35
  %v180 = vunpack.c.l.b16 %v36
  %v181 = vunpack.c.l.b16 %v37
  %v182 = vunpack.c.l.b16 %v38
  %v183 = vunpack.c.l.b16 %v39
  %v184 = vunpack.c.l.b16 %v40
  %v185 = vunpack.c.l.b16 %v41
  %v186 = vunpack.c.l.b16 %v42
  %v187 = vunpack.c.l.b16 %v43
  %v188 = vunpack.c.l.b16 %v44
  %v189 = vunpack.c.l.b16 %v45
  %v190 = vunpack.c.l.b16 %v46
  %v191 = vunpack.c.l.b16 %v47
  %v192 = vunpack.c.l.b16 %v48
  %v193 = vunpack.c.l.b16 %v49
  %v194 = vunpack.c.l.b16 %v50
  %v195 = vunpack.c.l.b16 %v51
  %v196 = vunpack.c.l.b16 %v52
  %v197 = vunpack.c.l.b16 %v53
  %v198 = vunpack.c.l.b16 %v54
  %v199 = vunpack.c.l.b16 %v55
  %v200 = vunpack.c.l.b16 %v56
  %v201 = vunpack.c.l.b16 %v57
  %v202 = vunpack.c.l.b16 %v58
  %v203 = vunpack.c.l.b16 %v59
  %v204 = vunpack.c.l.b16 %v60
  %v205 = vunpack.c.l.b16 %v61
  %v206 = vunpack.c.l.b16 %v62
  %v207 = vunpack.c.l.b16 %v63
  %v208 = vunpack.c.l.b16 %v64
  %v209 = vunpack.c.l.b16 %v65
  %v210 = vunpack.c.l.b16 %v66
  %v211 = vunpack.c.l.b16 %v67
  %v212 = vunpack.c.l.b16 %v68
  %v213 = vunpack.c.l.b16 %v69
  %v214 = vunpack.c.l.b16 %v70
  %v215 = vunpack.c.l.b16 %v71
  %v216 = vunpack.c.l.b16 %v72
  %v217 = vunpack.c.l.b16 %v73
  %v218 = vunpack.c.l.b16 %v74
  %v219 = vunpack.c.l.b16 %v75
  %v220 = vunpack.c.l.b16 %v76
  %v221 = vunpack.c.l.b16 %v77
  %v222 = vpack.c.b16 %v159, %v158
  %v223 = vpack.c.b16 %v161, %v160
  %v224 = vpack.c.b16 %v163, %v162
  %v225 = vpack.c.b16 %v165, %v164
  %v226 = vpack.c.b16 %v167, %v166
  %v227 = vpack.c.b16 %v169, %v168
  %v228 = vpack.c.b16 %v171, %v170
  %v229 = vpack.c.b16 %v173, %v172
  %v230 = vpack.c.b16 %v175, %v174
  %v231 = vpack.c.b16 %v177, %v176
  %v232 = vpack.c.b16 %v179, %v178
  %v233 = vpack.c.b16 %v181, %v180
  %v234 = vpack.c.b16 %v183, %v182
  %v235 = vpack.c.b16 %v185, %v184
  %v236 = vpack.c.b16 %v187, %v186
  %v237 = vpack.c.b16 %v189, %v188
  %v238 = vpack.c.b16 %v191, %v190
  %v239 = vpack.c.b16 %v193, %v192
  %v240 = vpack.c.b16 %v195, %v194
  %v241 = vpack.c.b16 %v197, %v196
  %v242 = vpack.c.b16 %v199, %v198
  %v243 = vpack.c.b16 %v201, %v200
  %v244 = vpack.c.b16 %v203, %v202
  %v245 = vpack.c.b16 %v205, %v204
  %v246 = vpack.c.b16 %v207, %v206
  %v247 = vpack.c.b16 %v209, %v208
  %v248 = vpack.c.b16 %v211, %v210
  %v249 = vpack.c.b16 %v213, %v212
  %v250 = vpack.c.b16 %v215, %v214
  %v251 = vpack.c.b16 %v217, %v216
  %v252 = vpack.c.b16 %v219, %v218
  %v253 = vpack.c.b16 %v221, %v220
  %v302 = vunpack.c.l.b16 %v78
  %v303 = vunpack.c.l.b16 %v79
  %v304 = vunpack.c.l.b16 %v80
  %v305 = vunpack.c.l.b16 %v81
  %v306 = vunpack.c.l.b16 %v82
  %v307 = vunpack.c.l.b16 %v83
  %v308 = vunpack.c.l.b16 %v84
  %v309 = vunpack.c.l.b16 %v85
  %v310 = vunpack.c.l.b16 %v86
  %v311 = vunpack.c.l.b16 %v87
  %v312 = vunpack.c.l.b16 %v88
  %v313 = vunpack.c.l.b16 %v89
  %v314 = vunpack.c.l.b16 %v90
  %v315 = vunpack.c.l.b16 %v91
  %v316 = vunpack.c.l.b16 %v92
  %v317 = vunpack.c.l.b16 %v93
  %v318 = vpack.c.b16 %v303, %v302
  %v319 = vpack.c.b16 %v305, %v304
  %v320 = vpack.c.b16 %v307, %v306
  %v321 = vpack.c.b16 %v309, %v308
  %v322 = vpack.c.b16 %v311, %v310
  %v323 = vpack.c.b16 %v313, %v312
  %v324 = vpack.c.b16 %v315, %v314
  %v325 = vpack.c.b16 %v317, %v316
  %334 = vmatprep.subr.bf16.mxu0 0
  %335 = vmatpush1.bf16.msra.mxu0 %v318
  %336 = vmatprep.subr.bf16.mxu0 0
  %337 = vmatpush1.bf16.msra.mxu0 %v319
  %338 = vmatprep.subr.bf16.mxu0 0
  %339 = vmatpush1.bf16.msra.mxu0 %v320
  %340 = vmatprep.subr.bf16.mxu0 0
  %341 = vmatpush1.bf16.msra.mxu0 %v321
  %342 = vmatprep.subr.bf16.mxu0 0
  %343 = vmatpush1.bf16.msra.mxu0 %v322
  %344 = vmatprep.subr.bf16.mxu0 0
  %345 = vmatpush1.bf16.msra.mxu0 %v323
  %346 = vmatprep.subr.bf16.mxu0 0
  %347 = vmatpush1.bf16.msra.mxu0 %v324
  %348 = vmatprep.subr.bf16.mxu0 0
  %349 = vmatpush1.bf16.msra.mxu0 %v325
  %350 = vmatprep.subr.bf16.mxu0 0
  %351 = vmatpush1.bf16.msra.mxu0 0
  %352 = vmatprep.subr.bf16.mxu0 0
  %353 = vmatpush1.bf16.msra.mxu0 0
  %354 = vmatprep.subr.bf16.mxu0 0
  %355 = vmatpush1.bf16.msra.mxu0 0
  %356 = vmatprep.subr.bf16.mxu0 0
  %357 = vmatpush1.bf16.msra.mxu0 0
  %358 = vmatprep.subr.bf16.mxu0 0
  %359 = vmatpush1.bf16.msra.mxu0 0
  %360 = vmatprep.subr.bf16.mxu0 0
  %361 = vmatpush1.bf16.msra.mxu0 0
  %362 = vmatprep.subr.bf16.mxu0 0
  %363 = vmatpush1.bf16.msra.mxu0 0
  %364 = vmatprep.subr.bf16.mxu0 0
  %365 = vmatpush1.bf16.msra.mxu0 0
  %366 = vmatprep.mubr.bf16.mxu0 0
  %367 = vmatmul.mubr.bf16.gmra.mrb[0].mxu0 %v222
  %v368 = vpop.f32.mrb[0].mxu0
  %v369 = vadd.f32 0.0, %v368
  %v370 = vpop.f32.mrb[0].mxu0
  %v371 = vpop.f32.mrb[0].mxu0
  %v372 = vadd.f32 0.0, %v371
  %v373 = vpop.f32.mrb[0].mxu0
  %374 = vmatprep.mubr.bf16.mxu0 0
  %375 = vmatmul.mubr.bf16.gmra.mrb[0].mxu0 %v223
  %v376 = vpop.f32.mrb[0].mxu0
  %v377 = vadd.f32 0.0, %v376
  %v378 = vpop.f32.mrb[0].mxu0
  %v379 = vpop.f32.mrb[0].mxu0
  %v380 = vadd.f32 0.0, %v379
  %v381 = vpop.f32.mrb[0].mxu0
  %382 = vmatprep.mubr.bf16.mxu0 0
  %383 = vmatmul.mubr.bf16.gmra.mrb[0].mxu0 %v224
  %v384 = vpop.f32.mrb[0].mxu0
  %v385 = vadd.f32 0.0, %v384
  %v386 = vpop.f32.mrb[0].mxu0
  %v387 = vpop.f32.mrb[0].mxu0
  %v388 = vadd.f32 0.0, %v387
  %v389 = vpop.f32.mrb[0].mxu0
  %390 = vmatprep.mubr.bf16.mxu0 0
  %391 = vmatmul.mubr.bf16.gmra.mrb[0].mxu0 %v225
  %v392 = vpop.f32.mrb[0].mxu0
  %v393 = vadd.f32 0.0, %v392
  %v394 = vpop.f32.mrb[0].mxu0
  %v395 = vpop.f32.mrb[0].mxu0
  %v396 = vadd.f32 0.0, %v395
  %v397 = vpop.f32.mrb[0].mxu0
  %398 = vmatprep.mubr.bf16.mxu0 0
  %399 = vmatmul.mubr.bf16.gmra.mrb[0].mxu0 %v226
  %v400 = vpop.f32.mrb[0].mxu0
  %v401 = vadd.f32 0.0, %v400
  %v402 = vpop.f32.mrb[0].mxu0
  %v403 = vpop.f32.mrb[0].mxu0
  %v404 = vadd.f32 0.0, %v403
  %v405 = vpop.f32.mrb[0].mxu0
  %406 = vmatprep.mubr.bf16.mxu0 0
  %407 = vmatmul.mubr.bf16.gmra.mrb[0].mxu0 %v227
  %v408 = vpop.f32.mrb[0].mxu0
  %v409 = vadd.f32 0.0, %v408
  %v410 = vpop.f32.mrb[0].mxu0
  %v411 = vpop.f32.mrb[0].mxu0
  %v412 = vadd.f32 0.0, %v411
  %v413 = vpop.f32.mrb[0].mxu0
  %414 = vmatprep.mubr.bf16.mxu0 0
  %415 = vmatmul.mubr.bf16.gmra.mrb[0].mxu0 %v228
  %v416 = vpop.f32.mrb[0].mxu0
  %v417 = vadd.f32 0.0, %v416
  %v418 = vpop.f32.mrb[0].mxu0
  %v419 = vpop.f32.mrb[0].mxu0
  %v420 = vadd.f32 0.0, %v419
  %v421 = vpop.f32.mrb[0].mxu0
  %422 = vmatprep.mubr.bf16.mxu0 0
  %423 = vmatmul.mubr.bf16.gmra.mrb[0].mxu0 %v229
  %v424 = vpop.f32.mrb[0].mxu0
  %v425 = vadd.f32 0.0, %v424
  %v426 = vpop.f32.mrb[0].mxu0
  %v427 = vpop.f32.mrb[0].mxu0
  %v428 = vadd.f32 0.0, %v427
  %v429 = vpop.f32.mrb[0].mxu0
  %430 = vmatprep.mubr.bf16.mxu0 0
  %431 = vmatmul.mubr.bf16.gmra.mrb[0].mxu0 %v230
  %v432 = vpop.f32.mrb[0].mxu0
  %v433 = vadd.f32 0.0, %v432
  %v434 = vpop.f32.mrb[0].mxu0
  %v435 = vpop.f32.mrb[0].mxu0
  %v436 = vadd.f32 0.0, %v435
  %v437 = vpop.f32.mrb[0].mxu0
  %438 = vmatprep.mubr.bf16.mxu0 0
  %439 = vmatmul.mubr.bf16.gmra.mrb[0].mxu0 %v231
  %v440 = vpop.f32.mrb[0].mxu0
  %v441 = vadd.f32 0.0, %v440
  %v442 = vpop.f32.mrb[0].mxu0
  %v443 = vpop.f32.mrb[0].mxu0
  %v444 = vadd.f32 0.0, %v443
  %v445 = vpop.f32.mrb[0].mxu0
  %446 = vmatprep.mubr.bf16.mxu0 0
  %447 = vmatmul.mubr.bf16.gmra.mrb[0].mxu0 %v232
  %v448 = vpop.f32.mrb[0].mxu0
  %v449 = vadd.f32 0.0, %v448
  %v450 = vpop.f32.mrb[0].mxu0
  %v451 = vpop.f32.mrb[0].mxu0
  %v452 = vadd.f32 0.0, %v451
  %v453 = vpop.f32.mrb[0].mxu0
  %454 = vmatprep.mubr.bf16.mxu0 0
  %455 = vmatmul.mubr.bf16.gmra.mrb[0].mxu0 %v233
  %v456 = vpop.f32.mrb[0].mxu0
  %v457 = vadd.f32 0.0, %v456
  %v458 = vpop.f32.mrb[0].mxu0
  %v459 = vpop.f32.mrb[0].mxu0
  %v460 = vadd.f32 0.0, %v459
  %v461 = vpop.f32.mrb[0].mxu0
  %462 = vmatprep.mubr.bf16.mxu0 0
  %463 = vmatmul.mubr.bf16.gmra.mrb[0].mxu0 %v234
  %v464 = vpop.f32.mrb[0].mxu0
  %v465 = vadd.f32 0.0, %v464
  %v466 = vpop.f32.mrb[0].mxu0
  %v467 = vpop.f32.mrb[0].mxu0
  %v468 = vadd.f32 0.0, %v467
  %v469 = vpop.f32.mrb[0].mxu0
  %470 = vmatprep.mubr.bf16.mxu0 0
  %471 = vmatmul.mubr.bf16.gmra.mrb[0].mxu0 %v235
  %v472 = vpop.f32.mrb[0].mxu0
  %v473 = vadd.f32 0.0, %v472
  %v474 = vpop.f32.mrb[0].mxu0
  %v475 = vpop.f32.mrb[0].mxu0
  %v476 = vadd.f32 0.0, %v475
  %v477 = vpop.f32.mrb[0].mxu0
  %478 = vmatprep.mubr.bf16.mxu0 0
  %479 = vmatmul.mubr.bf16.gmra.mrb[0].mxu0 %v236
  %v480 = vpop.f32.mrb[0].mxu0
  %v481 = vadd.f32 0.0, %v480
  %v482 = vpop.f32.mrb[0].mxu0
  %v483 = vpop.f32.mrb[0].mxu0
  %v484 = vadd.f32 0.0, %v483
  %v485 = vpop.f32.mrb[0].mxu0
  %486 = vmatprep.mubr.bf16.mxu0 0
  %487 = vmatmul.mubr.bf16.gmra.mrb[0].mxu0 %v237
  %v488 = vpop.f32.mrb[0].mxu0
  %v489 = vadd.f32 0.0, %v488
  %v490 = vpop.f32.mrb[0].mxu0
  %v491 = vpop.f32.mrb[0].mxu0
  %v492 = vadd.f32 0.0, %v491
  %v493 = vpop.f32.mrb[0].mxu0
  %494 = vmatprep.mubr.bf16.mxu0 0
  %495 = vmatmul.mubr.bf16.gmra.mrb[0].mxu0 %v238
  %v496 = vpop.f32.mrb[0].mxu0
  %v497 = vadd.f32 0.0, %v496
  %v498 = vpop.f32.mrb[0].mxu0
  %v499 = vpop.f32.mrb[0].mxu0
  %v500 = vadd.f32 0.0, %v499
  %v501 = vpop.f32.mrb[0].mxu0
  %502 = vmatprep.mubr.bf16.mxu0 0
  %503 = vmatmul.mubr.bf16.gmra.mrb[0].mxu0 %v239
  %v504 = vpop.f32.mrb[0].mxu0
  %v505 = vadd.f32 0.0, %v504
  %v506 = vpop.f32.mrb[0].mxu0
  %v507 = vpop.f32.mrb[0].mxu0
  %v508 = vadd.f32 0.0, %v507
  %v509 = vpop.f32.mrb[0].mxu0
  %510 = vmatprep.mubr.bf16.mxu0 0
  %511 = vmatmul.mubr.bf16.gmra.mrb[0].mxu0 %v240
  %v512 = vpop.f32.mrb[0].mxu0
  %v513 = vadd.f32 0.0, %v512
  %v514 = vpop.f32.mrb[0].mxu0
  %v515 = vpop.f32.mrb[0].mxu0
  %v516 = vadd.f32 0.0, %v515
  %v517 = vpop.f32.mrb[0].mxu0
  %518 = vmatprep.mubr.bf16.mxu0 0
  %519 = vmatmul.mubr.bf16.gmra.mrb[0].mxu0 %v241
  %v520 = vpop.f32.mrb[0].mxu0
  %v521 = vadd.f32 0.0, %v520
  %v522 = vpop.f32.mrb[0].mxu0
  %v523 = vpop.f32.mrb[0].mxu0
  %v524 = vadd.f32 0.0, %v523
  %v525 = vpop.f32.mrb[0].mxu0
  %526 = vmatprep.mubr.bf16.mxu0 0
  %527 = vmatmul.mubr.bf16.gmra.mrb[0].mxu0 %v242
  %v528 = vpop.f32.mrb[0].mxu0
  %v529 = vadd.f32 0.0, %v528
  %v530 = vpop.f32.mrb[0].mxu0
  %v531 = vpop.f32.mrb[0].mxu0
  %v532 = vadd.f32 0.0, %v531
  %v533 = vpop.f32.mrb[0].mxu0
  %534 = vmatprep.mubr.bf16.mxu0 0
  %535 = vmatmul.mubr.bf16.gmra.mrb[0].mxu0 %v243
  %v536 = vpop.f32.mrb[0].mxu0
  %v537 = vadd.f32 0.0, %v536
  %v538 = vpop.f32.mrb[0].mxu0
  %v539 = vpop.f32.mrb[0].mxu0
  %v540 = vadd.f32 0.0, %v539
  %v541 = vpop.f32.mrb[0].mxu0
  %542 = vmatprep.mubr.bf16.mxu0 0
  %543 = vmatmul.mubr.bf16.gmra.mrb[0].mxu0 %v244
  %v544 = vpop.f32.mrb[0].mxu0
  %v545 = vadd.f32 0.0, %v544
  %v546 = vpop.f32.mrb[0].mxu0
  %v547 = vpop.f32.mrb[0].mxu0
  %v548 = vadd.f32 0.0, %v547
  %v549 = vpop.f32.mrb[0].mxu0
  %550 = vmatprep.mubr.bf16.mxu0 0
  %551 = vmatmul.mubr.bf16.gmra.mrb[0].mxu0 %v245
  %v552 = vpop.f32.mrb[0].mxu0
  %v553 = vadd.f32 0.0, %v552
  %v554 = vpop.f32.mrb[0].mxu0
  %v555 = vpop.f32.mrb[0].mxu0
  %v556 = vadd.f32 0.0, %v555
  %v557 = vpop.f32.mrb[0].mxu0
  %558 = vmatprep.mubr.bf16.mxu0 0
  %559 = vmatmul.mubr.bf16.gmra.mrb[0].mxu0 %v246
  %v560 = vpop.f32.mrb[0].mxu0
  %v561 = vadd.f32 0.0, %v560
  %v562 = vpop.f32.mrb[0].mxu0
  %v563 = vpop.f32.mrb[0].mxu0
  %v564 = vadd.f32 0.0, %v563
  %v565 = vpop.f32.mrb[0].mxu0
  %566 = vmatprep.mubr.bf16.mxu0 0
  %567 = vmatmul.mubr.bf16.gmra.mrb[0].mxu0 %v247
  %v568 = vpop.f32.mrb[0].mxu0
  %v569 = vadd.f32 0.0, %v568
  %v570 = vpop.f32.mrb[0].mxu0
  %v571 = vpop.f32.mrb[0].mxu0
  %v572 = vadd.f32 0.0, %v571
  %v573 = vpop.f32.mrb[0].mxu0
  %574 = vmatprep.mubr.bf16.mxu0 0
  %575 = vmatmul.mubr.bf16.gmra.mrb[0].mxu0 %v248
  %v576 = vpop.f32.mrb[0].mxu0
  %v577 = vadd.f32 0.0, %v576
  %v578 = vpop.f32.mrb[0].mxu0
  %v579 = vpop.f32.mrb[0].mxu0
  %v580 = vadd.f32 0.0, %v579
  %v581 = vpop.f32.mrb[0].mxu0
  %582 = vmatprep.mubr.bf16.mxu0 0
  %583 = vmatmul.mubr.bf16.gmra.mrb[0].mxu0 %v249
  %v584 = vpop.f32.mrb[0].mxu0
  %v585 = vadd.f32 0.0, %v584
  %v586 = vpop.f32.mrb[0].mxu0
  %v587 = vpop.f32.mrb[0].mxu0
  %v588 = vadd.f32 0.0, %v587
  %v589 = vpop.f32.mrb[0].mxu0
  %590 = vmatprep.mubr.bf16.mxu0 0
  %591 = vmatmul.mubr.bf16.gmra.mrb[0].mxu0 %v250
  %v592 = vpop.f32.mrb[0].mxu0
  %v593 = vadd.f32 0.0, %v592
  %v594 = vpop.f32.mrb[0].mxu0
  %v595 = vpop.f32.mrb[0].mxu0
  %v596 = vadd.f32 0.0, %v595
  %v597 = vpop.f32.mrb[0].mxu0
  %598 = vmatprep.mubr.bf16.mxu0 0
  %599 = vmatmul.mubr.bf16.gmra.mrb[0].mxu0 %v251
  %v600 = vpop.f32.mrb[0].mxu0
  %v601 = vadd.f32 0.0, %v600
  %v602 = vpop.f32.mrb[0].mxu0
  %v603 = vpop.f32.mrb[0].mxu0
  %v604 = vadd.f32 0.0, %v603
  %v605 = vpop.f32.mrb[0].mxu0
  %606 = vmatprep.mubr.bf16.mxu0 0
  %607 = vmatmul.mubr.bf16.gmra.mrb[0].mxu0 %v252
  %v608 = vpop.f32.mrb[0].mxu0
  %v609 = vadd.f32 0.0, %v608
  %v610 = vpop.f32.mrb[0].mxu0
  %v611 = vpop.f32.mrb[0].mxu0
  %v612 = vadd.f32 0.0, %v611
  %v613 = vpop.f32.mrb[0].mxu0
  %614 = vmatprep.mubr.bf16.mxu0 0
  %615 = vmatmul.mubr.bf16.gmra.mrb[0].mxu0 %v253
  %v616 = vpop.f32.mrb[0].mxu0
  %v617 = vadd.f32 0.0, %v616
  %v618 = vpop.f32.mrb[0].mxu0
  %v619 = vpop.f32.mrb[0].mxu0
  %v620 = vadd.f32 0.0, %v619
  %v621 = vpop.f32.mrb[0].mxu0
  %622 = vdwg.mxu0
  %v623 = vadd.f32 %v369, %v372
  %v624 = vadd.f32 %v623, %v377
  %v625 = vadd.f32 %v624, %v380
  %v626 = vadd.f32 %v625, %v385
  %v627 = vadd.f32 %v626, %v388
  %v628 = vadd.f32 %v627, %v393
  %v629 = vadd.f32 %v628, %v396
  %v630 = vadd.f32 %v629, %v401
  %v631 = vadd.f32 %v630, %v404
  %v632 = vadd.f32 %v631, %v409
  %v633 = vadd.f32 %v632, %v412
  %v634 = vadd.f32 %v633, %v417
  %v635 = vadd.f32 %v634, %v420
  %v636 = vadd.f32 %v635, %v425
  %v637 = vadd.f32 %v636, %v428
  %v638 = vadd.f32 %v637, %v433
  %v639 = vadd.f32 %v638, %v436
  %v640 = vadd.f32 %v639, %v441
  %v641 = vadd.f32 %v640, %v444
  %v642 = vadd.f32 %v641, %v449
  %v643 = vadd.f32 %v642, %v452
  %v644 = vadd.f32 %v643, %v457
  %v645 = vadd.f32 %v644, %v460
  %v646 = vadd.f32 %v645, %v465
  %v647 = vadd.f32 %v646, %v468
  %v648 = vadd.f32 %v647, %v473
  %v649 = vadd.f32 %v648, %v476
  %v650 = vadd.f32 %v649, %v481
  %v651 = vadd.f32 %v650, %v484
  %v652 = vadd.f32 %v651, %v489
  %v653 = vadd.f32 %v652, %v492
  %v654 = vadd.f32 %v653, %v497
  %v655 = vadd.f32 %v654, %v500
  %v656 = vadd.f32 %v655, %v505
  %v657 = vadd.f32 %v656, %v508
  %v658 = vadd.f32 %v657, %v513
  %v659 = vadd.f32 %v658, %v516
  %v660 = vadd.f32 %v659, %v521
  %v661 = vadd.f32 %v660, %v524
  %v662 = vadd.f32 %v661, %v529
  %v663 = vadd.f32 %v662, %v532
  %v664 = vadd.f32 %v663, %v537
  %v665 = vadd.f32 %v664, %v540
  %v666 = vadd.f32 %v665, %v545
  %v667 = vadd.f32 %v666, %v548
  %v668 = vadd.f32 %v667, %v553
  %v669 = vadd.f32 %v668, %v556
  %v670 = vadd.f32 %v669, %v561
  %v671 = vadd.f32 %v670, %v564
  %v672 = vadd.f32 %v671, %v569
  %v673 = vadd.f32 %v672, %v572
  %v674 = vadd.f32 %v673, %v577
  %v675 = vadd.f32 %v674, %v580
  %v676 = vadd.f32 %v675, %v585
  %v677 = vadd.f32 %v676, %v588
  %v678 = vadd.f32 %v677, %v593
  %v679 = vadd.f32 %v678, %v596
  %v680 = vadd.f32 %v679, %v601
  %v681 = vadd.f32 %v680, %v604
  %v682 = vadd.f32 %v681, %v609
  %v683 = vadd.f32 %v682, %v612
  %v684 = vadd.f32 %v683, %v617
  %v685 = vadd.f32 %v684, %v620
  %686 = vst [vmem:[%s2] sm:$0xff] %v685
  %v687 = vmul.f32 %v369, %v369
  %v688 = vmul.f32 %v372, %v372
  %v689 = vmul.f32 %v377, %v377
  %v690 = vmul.f32 %v380, %v380
  %v691 = vmul.f32 %v385, %v385
  %v692 = vmul.f32 %v388, %v388
  %v693 = vmul.f32 %v393, %v393
  %v694 = vmul.f32 %v396, %v396
  %v695 = vmul.f32 %v401, %v401
  %v696 = vmul.f32 %v404, %v404
  %v697 = vmul.f32 %v409, %v409
  %v698 = vmul.f32 %v412, %v412
  %v699 = vmul.f32 %v417, %v417
  %v700 = vmul.f32 %v420, %v420
  %v701 = vmul.f32 %v425, %v425
  %v702 = vmul.f32 %v428, %v428
  %v703 = vmul.f32 %v433, %v433
  %v704 = vmul.f32 %v436, %v436
  %v705 = vmul.f32 %v441, %v441
  %v706 = vmul.f32 %v444, %v444
  %v707 = vmul.f32 %v449, %v449
  %v708 = vmul.f32 %v452, %v452
  %v709 = vmul.f32 %v457, %v457
  %v710 = vmul.f32 %v460, %v460
  %v711 = vmul.f32 %v465, %v465
  %v712 = vmul.f32 %v468, %v468
  %v713 = vmul.f32 %v473, %v473
  %v714 = vmul.f32 %v476, %v476
  %v715 = vmul.f32 %v481, %v481
  %v716 = vmul.f32 %v484, %v484
  %v717 = vmul.f32 %v489, %v489
  %v718 = vmul.f32 %v492, %v492
  %v719 = vmul.f32 %v497, %v497
  %v720 = vmul.f32 %v500, %v500
  %v721 = vmul.f32 %v505, %v505
  %v722 = vmul.f32 %v508, %v508
  %v723 = vmul.f32 %v513, %v513
  %v724 = vmul.f32 %v516, %v516
  %v725 = vmul.f32 %v521, %v521
  %v726 = vmul.f32 %v524, %v524
  %v727 = vmul.f32 %v529, %v529
  %v728 = vmul.f32 %v532, %v532
  %v729 = vmul.f32 %v537, %v537
  %v730 = vmul.f32 %v540, %v540
  %v731 = vmul.f32 %v545, %v545
  %v732 = vmul.f32 %v548, %v548
  %v733 = vmul.f32 %v553, %v553
  %v734 = vmul.f32 %v556, %v556
  %v735 = vmul.f32 %v561, %v561
  %v736 = vmul.f32 %v564, %v564
  %v737 = vmul.f32 %v569, %v569
  %v738 = vmul.f32 %v572, %v572
  %v739 = vmul.f32 %v577, %v577
  %v740 = vmul.f32 %v580, %v580
  %v741 = vmul.f32 %v585, %v585
  %v742 = vmul.f32 %v588, %v588
  %v743 = vmul.f32 %v593, %v593
  %v744 = vmul.f32 %v596, %v596
  %v745 = vmul.f32 %v601, %v601
  %v746 = vmul.f32 %v604, %v604
  %v747 = vmul.f32 %v609, %v609
  %v748 = vmul.f32 %v612, %v612
  %v749 = vmul.f32 %v617, %v617
  %v750 = vmul.f32 %v620, %v620
  %v751 = vadd.f32 %v687, %v688
  %v752 = vadd.f32 %v751, %v689
  %v753 = vadd.f32 %v752, %v690
  %v754 = vadd.f32 %v753, %v691
  %v755 = vadd.f32 %v754, %v692
  %v756 = vadd.f32 %v755, %v693
  %v757 = vadd.f32 %v756, %v694
  %v758 = vadd.f32 %v757, %v695
  %v759 = vadd.f32 %v758, %v696
  %v760 = vadd.f32 %v759, %v697
  %v761 = vadd.f32 %v760, %v698
  %v762 = vadd.f32 %v761, %v699
  %v763 = vadd.f32 %v762, %v700
  %v764 = vadd.f32 %v763, %v701
  %v765 = vadd.f32 %v764, %v702
  %v766 = vadd.f32 %v765, %v703
  %v767 = vadd.f32 %v766, %v704
  %v768 = vadd.f32 %v767, %v705
  %v769 = vadd.f32 %v768, %v706
  %v770 = vadd.f32 %v769, %v707
  %v771 = vadd.f32 %v770, %v708
  %v772 = vadd.f32 %v771, %v709
  %v773 = vadd.f32 %v772, %v710
  %v774 = vadd.f32 %v773, %v711
  %v775 = vadd.f32 %v774, %v712
  %v776 = vadd.f32 %v775, %v713
  %v777 = vadd.f32 %v776, %v714
  %v778 = vadd.f32 %v777, %v715
  %v779 = vadd.f32 %v778, %v716
  %v780 = vadd.f32 %v779, %v717
  %v781 = vadd.f32 %v780, %v718
  %v782 = vadd.f32 %v781, %v719
  %v783 = vadd.f32 %v782, %v720
  %v784 = vadd.f32 %v783, %v721
  %v785 = vadd.f32 %v784, %v722
  %v786 = vadd.f32 %v785, %v723
  %v787 = vadd.f32 %v786, %v724
  %v788 = vadd.f32 %v787, %v725
  %v789 = vadd.f32 %v788, %v726
  %v790 = vadd.f32 %v789, %v727
  %v791 = vadd.f32 %v790, %v728
  %v792 = vadd.f32 %v791, %v729
  %v793 = vadd.f32 %v792, %v730
  %v794 = vadd.f32 %v793, %v731
  %v795 = vadd.f32 %v794, %v732
  %v796 = vadd.f32 %v795, %v733
  %v797 = vadd.f32 %v796, %v734
  %v798 = vadd.f32 %v797, %v735
  %v799 = vadd.f32 %v798, %v736
  %v800 = vadd.f32 %v799, %v737
  %v801 = vadd.f32 %v800, %v738
  %v802 = vadd.f32 %v801, %v739
  %v803 = vadd.f32 %v802, %v740
  %v804 = vadd.f32 %v803, %v741
  %v805 = vadd.f32 %v804, %v742
  %v806 = vadd.f32 %v805, %v743
  %v807 = vadd.f32 %v806, %v744
  %v808 = vadd.f32 %v807, %v745
  %v809 = vadd.f32 %v808, %v746
  %v810 = vadd.f32 %v809, %v747
  %v811 = vadd.f32 %v810, %v748
  %v812 = vadd.f32 %v811, %v749
  %v813 = vadd.f32 %v812, %v750
  %814 = vst [vmem:[%s3] sm:$0xff] %v813
  // Predicated region
  $region10: #{tcn_forward.2} parent=0 // pred_check
    _
  $region11: #{tcn_forward.2} parent=0 // pred_check_branch
    %816 = sbr.rel (0) target = $region13
  $region12: #{tcn_forward.2} parent=0 // pred_region
    _
  $region13: #{tcn_forward.2} parent=0 // pred_fallthru
    _
  // Predicated region
  $region14: #{tcn_forward.2} parent=0 // pred_check
    _
  $region15: #{tcn_forward.2} parent=0 // pred_check_branch
    %818 = sbr.rel (0) target = $region17
  $region16: #{tcn_forward.2} parent=0 // pred_region
    _
  $region17: #{tcn_forward.2} parent=0 // pred_fallthru
    _
  // Predicated region
  $region18: #{tcn_forward.2} parent=0 // pred_check
    _
  $region19: #{tcn_forward.2} parent=0 // pred_check_branch
    %820 = sbr.rel (0) target = $region21
  $region20: #{tcn_forward.2} parent=0 // pred_region
    _
  $region21: #{tcn_forward.2} parent=0 // pred_fallthru
    _
  // Predicated region
  $region22: #{tcn_forward.2} parent=0 // pred_check
    _
  $region23: #{tcn_forward.2} parent=0 // pred_check_branch
    %822 = sbr.rel (0) target = $region25
  $region24: #{tcn_forward.2} parent=0 // pred_region
    _
  $region25: #{tcn_forward.2} parent=0 // pred_fallthru
    _

</llo_original>
